<compile_context>
chip_gen: v7x
topology: tpu7x:2x2x1
jax: 0.10.0
libtpu: 0.0.40
codegen_flags: <defaults>
</compile_context>

<pallas_src>
import jax
import jax.numpy as jnp
from jax.experimental import pallas as pl
from jax.experimental.pallas import tpu as pltpu


def _round_up(x, m):
    return ((x + m - 1) // m) * m


def autorec_kernel(x_ref, w_enc_ref, b_enc_ref, w_dec_ref, b_dec_ref, o_ref):
    # encoder: Linear(n_users -> n_factors) + Sigmoid (f32 MXU accumulation, f32 EUP sigmoid).
    h = jnp.dot(x_ref[...].astype(w_enc_ref.dtype), w_enc_ref[...],
                preferred_element_type=jnp.float32)
    h = jax.nn.sigmoid(h + b_enc_ref[...])
    # decoder: Linear(n_factors -> n_users) + Identity.
    y = jnp.dot(h.astype(w_dec_ref.dtype), w_dec_ref[...],
                preferred_element_type=jnp.float32)
    o_ref[...] = (y + b_dec_ref[...]).astype(o_ref.dtype)


def _vmem_capacity_bytes():
    """Per-TensorCore VMEM capacity; conservative 64 MiB (v7x) if the query fails."""
    try:
        info = pltpu.get_tpu_info()
        cap = getattr(info, "vmem_capacity_bytes", None)
        if cap:
            return int(cap)
    except Exception:
        pass
    return 64 << 20


def autorec_forward(x, w_enc, b_enc, w_dec, b_dec, *, tb=256, out_dtype=None):
    """x: (B, n_users); w_enc: (n_users, n_factors); w_dec: (n_factors, n_users);
    biases: (1, n_factors) / (1, n_users) f32.  Returns (B, n_users) in out_dtype."""
    B, n_users = x.shape
    assert w_enc.shape[0] == n_users
    n_factors = w_enc.shape[1]
    out_dtype = jnp.dtype(out_dtype) if out_dtype is not None else x.dtype

    # ---- lane-dense padding of the feature dims (multiples of 128) -------------------
    U = _round_up(n_users, 128)
    F = _round_up(n_factors, 128)
    if U != n_users:
        x = jnp.pad(x, ((0, 0), (0, U - n_users)))
        w_enc = jnp.pad(w_enc, ((0, U - n_users), (0, 0)))
        w_dec = jnp.pad(w_dec, ((0, 0), (0, U - n_users)))
        b_dec = jnp.pad(b_dec, ((0, 0), (0, U - n_users)))
    if F != n_factors:
        w_enc = jnp.pad(w_enc, ((0, 0), (0, F - n_factors)))
        b_enc = jnp.pad(b_enc, ((0, 0), (0, F - n_factors)))
        w_dec = jnp.pad(w_dec, ((0, F - n_factors), (0, 0)))

    wbytes = jnp.dtype(w_enc.dtype).itemsize
    xbytes = jnp.dtype(x.dtype).itemsize
    obytes = jnp.dtype(out_dtype).itemsize

    # ---- VMEM budget & batch-tile sizing ----------------------------------------------
    vmem_cap = _vmem_capacity_bytes()
    budget = int(0.85 * vmem_cap) - (8 << 20)            # leave compiler scratch headroom
    # Resident (single-buffered) weights + sublane-padded biases (f32 accounting for biases).
    resident = 2 * U * F * wbytes + 8 * (F + U) * 4
    # Per-batch-row streaming cost: double-buffered x and y tiles + f32 intermediates h / y.
    per_row = 2 * U * xbytes + 2 * U * obytes + (F + U) * 4
    tb_cap = max(8, ((budget - resident) // per_row) // 8 * 8)

    TB = max(8, min(_round_up(tb, 8), tb_cap, _round_up(B, 8)))
    # v7x megacore: ensure the batch grid has >= 2 steps whenever the batch allows it.
    if TB >= B and B > 8:
        TB = max(8, _round_up((B + 1) // 2, 8))
    B_pad = _round_up(B, TB)
    if B_pad != B:
        x = jnp.pad(x, ((0, B_pad - B), (0, 0)))
    grid = B_pad // TB

    vmem_bytes = resident + TB * per_row
    vmem_limit = int(min(max(int(vmem_bytes * 1.25) + (2 << 20), 4 << 20),
                         int(0.9 * vmem_cap)))

    cost = pl.CostEstimate(
        flops=4 * B_pad * U * F,                          # two matmuls
        transcendentals=B_pad * F,                        # sigmoid
        bytes_accessed=(B_pad * U * (xbytes + obytes)     # x in + y out
                        + 2 * U * F * wbytes              # weights
                        + (U + F) * 4),                   # biases
    )

    def build_call(single_buffer_weights):
        res = dict(pipeline_mode=pl.Buffered(1)) if single_buffer_weights else {}
        return pl.pallas_call(
            autorec_kernel,
            out_shape=jax.ShapeDtypeStruct((B_pad, U), out_dtype),
            grid_spec=pltpu.PrefetchScalarGridSpec(
                num_scalar_prefetch=0,
                grid=(grid,),
                in_specs=[
                    pl.BlockSpec((TB, U), lambda i: (i, 0)),         # x streams per step
                    pl.BlockSpec((U, F), lambda i: (0, 0), **res),   # W_enc resident
                    pl.BlockSpec((1, F), lambda i: (0, 0), **res),   # b_enc resident
                    pl.BlockSpec((F, U), lambda i: (0, 0), **res),   # W_dec resident
                    pl.BlockSpec((1, U), lambda i: (0, 0), **res),   # b_dec resident
                ],
                out_specs=pl.BlockSpec((TB, U), lambda i: (i, 0)),
            ),
            compiler_params=pltpu.CompilerParams(
                dimension_semantics=("parallel",),   # batch tiles independent (megacore)
                vmem_limit_bytes=vmem_limit,
            ),
            cost_estimate=cost,
        )

    try:
        out = build_call(True)(x, w_enc, b_enc, w_dec, b_dec)
    except Exception:
        # Fallback: default double-buffered resident operands (correct, more VMEM).
        out = build_call(False)(x, w_enc, b_enc, w_dec, b_dec)

    return out[:B, :n_users]
    # TODO(synk): for very large n_users where the resident weights exceed the v7x budget,
    # add a second grid axis tiling W_dec/b_dec over output columns (and the encoder over
    # its n_users reduction), or store weights in fp8 with per-channel scales.


def init_params(key, n_users, n_factors, param_dtype=jnp.float32):
    """Deterministic init mimicking nn.Linear's uniform(-1/sqrt(fan_in), 1/sqrt(fan_in)).
    Weights stored pre-transposed (in_features, out_features); biases kept in f32."""
    k1, k2, k3, k4 = jax.random.split(key, 4)
    bnd_enc = 1.0 / jnp.sqrt(n_users)
    bnd_dec = 1.0 / jnp.sqrt(n_factors)
    w_enc = jax.random.uniform(k1, (n_users, n_factors), jnp.float32, -bnd_enc, bnd_enc)
    b_enc = jax.random.uniform(k2, (1, n_factors), jnp.float32, -bnd_enc, bnd_enc)
    w_dec = jax.random.uniform(k3, (n_factors, n_users), jnp.float32, -bnd_dec, bnd_dec)
    b_dec = jax.random.uniform(k4, (1, n_users), jnp.float32, -bnd_dec, bnd_dec)
    return w_enc.astype(param_dtype), b_enc, w_dec.astype(param_dtype), b_dec


if __name__ == "__main__":
    # Small but representative shapes: n_users=300 / n_factors=200 (the module default)
    # are deliberately NOT multiples of 128 to exercise the lane-dense padding path;
    # batch=64 yields a 2-step pipelined grid (TB=32) so both v7x TensorCores get work.
    batch, n_users, n_factors = 64, 300, 200

    key = jax.random.PRNGKey(0)
    kx, kp = jax.random.split(key)
    x = jax.random.normal(kx, (batch, n_users), jnp.float32)

    # f32 weights (exact path).
    w_enc, b_enc, w_dec, b_dec = init_params(kp, n_users, n_factors, jnp.float32)
    out = jax.block_until_ready(autorec_forward(x, w_enc, b_enc, w_dec, b_dec))

    # Pure-JAX reference (same math as the PyTorch forward).
    h_ref = jax.nn.sigmoid(x @ w_enc + b_enc)
    y_ref = h_ref @ w_dec + b_dec
    assert out.shape == (batch, n_users)
    assert jnp.allclose(out, y_ref, atol=1e-4, rtol=1e-4)

    # bf16-weight path (halves resident VMEM + weight DMA; f32 MXU accumulation).
    # NOTE: activations are also cast to bf16 before the MXU -> looser tolerance expected.
    w_enc_b = w_enc.astype(jnp.bfloat16)
    w_dec_b = w_dec.astype(jnp.bfloat16)
    out_b = jax.block_until_ready(autorec_forward(x, w_enc_b, b_enc, w_dec_b, b_dec))
    assert out_b.shape == (batch, n_users)
    assert jnp.allclose(out_b, y_ref, atol=5e-2, rtol=5e-2)

    print("KERNEL_OK")
</pallas_src>

<mosaic_0001>
module attributes {stable_mosaic.version = 11 : i64} {
  func.func @autorec_kernel(%arg0: i32, %arg1: memref<32x384xf32, #tpu.memory_space<vmem>>, %arg2: memref<384x256xf32, #tpu.memory_space<vmem>>, %arg3: memref<1x256xf32, #tpu.memory_space<vmem>>, %arg4: memref<256x384xf32, #tpu.memory_space<vmem>>, %arg5: memref<1x384xf32, #tpu.memory_space<vmem>>, %arg6: memref<32x384xf32, #tpu.memory_space<vmem>>) attributes {dimension_semantics = [#tpu.dimension_semantics<parallel>], iteration_bounds = array<i64: 2>, scalar_prefetch = 0 : i64, scratch_operands = 0 : i64, tpu.core_type = #tpu.core_type<tc>, window_params = [{transform_indices = @transform_0, window_bounds = array<i64: 32, 384>}, {pipeline_mode = #tpu.pipeline_mode<synchronous>, transform_indices = @transform_1, window_bounds = array<i64: 384, 256>}, {pipeline_mode = #tpu.pipeline_mode<synchronous>, transform_indices = @transform_2, window_bounds = array<i64: 1, 256>}, {pipeline_mode = #tpu.pipeline_mode<synchronous>, transform_indices = @transform_3, window_bounds = array<i64: 256, 384>}, {pipeline_mode = #tpu.pipeline_mode<synchronous>, transform_indices = @transform_4, window_bounds = array<i64: 1, 384>}, {transform_indices = @transform_5, window_bounds = array<i64: 32, 384>}]} {
    %c0 = arith.constant 0 : index
    %c0_0 = arith.constant 0 : index
    %0 = vector.load %arg1[%c0, %c0_0] : memref<32x384xf32, #tpu.memory_space<vmem>>, vector<32x384xf32>
    %c0_1 = arith.constant 0 : index
    %c0_2 = arith.constant 0 : index
    %1 = vector.load %arg2[%c0_1, %c0_2] : memref<384x256xf32, #tpu.memory_space<vmem>>, vector<384x256xf32>
    %cst = arith.constant dense<0.000000e+00> : vector<32x256xf32>
    %2 = tpu.matmul %0, %1, %cst {dimension_numbers = #tpu.dot_dimension_numbers<[1], [0], [0], [1], [0, 0, 1, 1], [], []>} : vector<32x384xf32>, vector<384x256xf32>, vector<32x256xf32> -> vector<32x256xf32>
    %c0_3 = arith.constant 0 : index
    %c0_4 = arith.constant 0 : index
    %3 = vector.load %arg3[%c0_3, %c0_4] : memref<1x256xf32, #tpu.memory_space<vmem>>, vector<1x256xf32>
    %4 = vector.broadcast %3 : vector<1x256xf32> to vector<32x256xf32>
    %5 = arith.addf %2, %4 : vector<32x256xf32>
    %6 = arith.negf %5 : vector<32x256xf32>
    %7 = math.exp %6 : vector<32x256xf32>
    %cst_5 = arith.constant 1.000000e+00 : f32
    %8 = vector.broadcast %cst_5 : f32 to vector<32x256xf32>
    %9 = arith.addf %8, %7 : vector<32x256xf32>
    %10 = arith.divf %8, %9 : vector<32x256xf32>
    %c0_6 = arith.constant 0 : index
    %c0_7 = arith.constant 0 : index
    %11 = vector.load %arg4[%c0_6, %c0_7] : memref<256x384xf32, #tpu.memory_space<vmem>>, vector<256x384xf32>
    %cst_8 = arith.constant dense<0.000000e+00> : vector<32x384xf32>
    %12 = tpu.matmul %10, %11, %cst_8 {dimension_numbers = #tpu.dot_dimension_numbers<[1], [0], [0], [1], [0, 0, 1, 1], [], []>} : vector<32x256xf32>, vector<256x384xf32>, vector<32x384xf32> -> vector<32x384xf32>
    %c0_9 = arith.constant 0 : index
    %c0_10 = arith.constant 0 : index
    %13 = vector.load %arg5[%c0_9, %c0_10] : memref<1x384xf32, #tpu.memory_space<vmem>>, vector<1x384xf32>
    %14 = vector.broadcast %13 : vector<1x384xf32> to vector<32x384xf32>
    %15 = arith.addf %12, %14 : vector<32x384xf32>
    %c0_11 = arith.constant 0 : index
    %c0_12 = arith.constant 0 : index
    %16 = vector.load %arg6[%c0_11, %c0_12] : memref<32x384xf32, #tpu.memory_space<vmem>>, vector<32x384xf32>
    tpu.vector_store %arg6[%c0_11, %c0_12], %15 {strides = array<i32>} : memref<32x384xf32, #tpu.memory_space<vmem>>, vector<32x384xf32>,
    return
  }
  func.func @transform_0(%arg0: i32) -> (i32, i32) {
    %c0_i32 = arith.constant 0 : i32
    %c0_i32_0 = arith.constant 0 : i32
    return %arg0, %c0_i32 : i32, i32
  }
  func.func @transform_1(%arg0: i32) -> (i32, i32) {
    %c0_i32 = arith.constant 0 : i32
    %c0_i32_0 = arith.constant 0 : i32
    %c0_i32_1 = arith.constant 0 : i32
    return %c0_i32, %c0_i32_0 : i32, i32
  }
  func.func @transform_2(%arg0: i32) -> (i32, i32) {
    %c0_i32 = arith.constant 0 : i32
    %c0_i32_0 = arith.constant 0 : i32
    %c0_i32_1 = arith.constant 0 : i32
    return %c0_i32, %c0_i32_0 : i32, i32
  }
  func.func @transform_3(%arg0: i32) -> (i32, i32) {
    %c0_i32 = arith.constant 0 : i32
    %c0_i32_0 = arith.constant 0 : i32
    %c0_i32_1 = arith.constant 0 : i32
    return %c0_i32, %c0_i32_0 : i32, i32
  }
  func.func @transform_4(%arg0: i32) -> (i32, i32) {
    %c0_i32 = arith.constant 0 : i32
    %c0_i32_0 = arith.constant 0 : i32
    %c0_i32_1 = arith.constant 0 : i32
    return %c0_i32, %c0_i32_0 : i32, i32
  }
  func.func @transform_5(%arg0: i32) -> (i32, i32) {
    %c0_i32 = arith.constant 0 : i32
    %c0_i32_0 = arith.constant 0 : i32
    return %arg0, %c0_i32 : i32, i32
  }
}

module attributes {stable_mosaic.version = 11 : i64} {
  func.func @autorec_kernel(%arg0: i32, %arg1: memref<32x384xf32, #tpu.memory_space<vmem>>, %arg2: memref<384x256xf32, #tpu.memory_space<vmem>>, %arg3: memref<1x256xf32, #tpu.memory_space<vmem>>, %arg4: memref<256x384xf32, #tpu.memory_space<vmem>>, %arg5: memref<1x384xf32, #tpu.memory_space<vmem>>, %arg6: memref<32x384xf32, #tpu.memory_space<vmem>>) attributes {dimension_semantics = [#tpu.dimension_semantics<parallel>], iteration_bounds = array<i64: 2>, scalar_prefetch = 0 : i64, scratch_operands = 0 : i64, tpu.core_type = #tpu.core_type<tc>, window_params = [{transform_indices = @transform_0, window_bounds = array<i64: 32, 384>}, {pipeline_mode = #tpu.pipeline_mode<synchronous>, transform_indices = @transform_1, window_bounds = array<i64: 384, 256>}, {pipeline_mode = #tpu.pipeline_mode<synchronous>, transform_indices = @transform_2, window_bounds = array<i64: 1, 256>}, {pipeline_mode = #tpu.pipeline_mode<synchronous>, transform_indices = @transform_3, window_bounds = array<i64: 256, 384>}, {pipeline_mode = #tpu.pipeline_mode<synchronous>, transform_indices = @transform_4, window_bounds = array<i64: 1, 384>}, {transform_indices = @transform_5, window_bounds = array<i64: 32, 384>}]} {
    %c0 = arith.constant 0 : index
    %c0_0 = arith.constant 0 : index
    %0 = vector.load %arg1[%c0, %c0_0] : memref<32x384xf32, #tpu.memory_space<vmem>>, vector<32x384xf32>
    %c0_1 = arith.constant 0 : index
    %c0_2 = arith.constant 0 : index
    %1 = vector.load %arg2[%c0_1, %c0_2] : memref<384x256xf32, #tpu.memory_space<vmem>>, vector<384x256xf32>
    %cst = arith.constant dense<0.000000e+00> : vector<32x256xf32>
    %2 = tpu.matmul %0, %1, %cst {dimension_numbers = #tpu.dot_dimension_numbers<[1], [0], [0], [1], [0, 0, 1, 1], [], []>} : vector<32x384xf32>, vector<384x256xf32>, vector<32x256xf32> -> vector<32x256xf32>
    %c0_3 = arith.constant 0 : index
    %c0_4 = arith.constant 0 : index
    %3 = vector.load %arg3[%c0_3, %c0_4] : memref<1x256xf32, #tpu.memory_space<vmem>>, vector<1x256xf32>
    %4 = vector.broadcast %3 : vector<1x256xf32> to vector<32x256xf32>
    %5 = arith.addf %2, %4 : vector<32x256xf32>
    %6 = arith.negf %5 : vector<32x256xf32>
    %7 = math.exp %6 : vector<32x256xf32>
    %cst_5 = arith.constant 1.000000e+00 : f32
    %8 = vector.broadcast %cst_5 : f32 to vector<32x256xf32>
    %9 = arith.addf %8, %7 : vector<32x256xf32>
    %10 = arith.divf %8, %9 : vector<32x256xf32>
    %c0_6 = arith.constant 0 : index
    %c0_7 = arith.constant 0 : index
    %11 = vector.load %arg4[%c0_6, %c0_7] : memref<256x384xf32, #tpu.memory_space<vmem>>, vector<256x384xf32>
    %cst_8 = arith.constant dense<0.000000e+00> : vector<32x384xf32>
    %12 = tpu.matmul %10, %11, %cst_8 {dimension_numbers = #tpu.dot_dimension_numbers<[1], [0], [0], [1], [0, 0, 1, 1], [], []>} : vector<32x256xf32>, vector<256x384xf32>, vector<32x384xf32> -> vector<32x384xf32>
    %c0_9 = arith.constant 0 : index
    %c0_10 = arith.constant 0 : index
    %13 = vector.load %arg5[%c0_9, %c0_10] : memref<1x384xf32, #tpu.memory_space<vmem>>, vector<1x384xf32>
    %14 = vector.broadcast %13 : vector<1x384xf32> to vector<32x384xf32>
    %15 = arith.addf %12, %14 : vector<32x384xf32>
    %c0_11 = arith.constant 0 : index
    %c0_12 = arith.constant 0 : index
    %16 = vector.load %arg6[%c0_11, %c0_12] : memref<32x384xf32, #tpu.memory_space<vmem>>, vector<32x384xf32>
    tpu.vector_store %arg6[%c0_11, %c0_12], %15 {strides = array<i32>} : memref<32x384xf32, #tpu.memory_space<vmem>>, vector<32x384xf32>,
    return
  }
  func.func @transform_0(%arg0: i32) -> (i32, i32) {
    %c0_i32 = arith.constant 0 : i32
    %c0_i32_0 = arith.constant 0 : i32
    return %arg0, %c0_i32 : i32, i32
  }
  func.func @transform_1(%arg0: i32) -> (i32, i32) {
    %c0_i32 = arith.constant 0 : i32
    %c0_i32_0 = arith.constant 0 : i32
    %c0_i32_1 = arith.constant 0 : i32
    return %c0_i32, %c0_i32_0 : i32, i32
  }
  func.func @transform_2(%arg0: i32) -> (i32, i32) {
    %c0_i32 = arith.constant 0 : i32
    %c0_i32_0 = arith.constant 0 : i32
    %c0_i32_1 = arith.constant 0 : i32
    return %c0_i32, %c0_i32_0 : i32, i32
  }
  func.func @transform_3(%arg0: i32) -> (i32, i32) {
    %c0_i32 = arith.constant 0 : i32
    %c0_i32_0 = arith.constant 0 : i32
    %c0_i32_1 = arith.constant 0 : i32
    return %c0_i32, %c0_i32_0 : i32, i32
  }
  func.func @transform_4(%arg0: i32) -> (i32, i32) {
    %c0_i32 = arith.constant 0 : i32
    %c0_i32_0 = arith.constant 0 : i32
    %c0_i32_1 = arith.constant 0 : i32
    return %c0_i32, %c0_i32_0 : i32, i32
  }
  func.func @transform_5(%arg0: i32) -> (i32, i32) {
    %c0_i32 = arith.constant 0 : i32
    %c0_i32_0 = arith.constant 0 : i32
    return %arg0, %c0_i32 : i32, i32
  }
}

</mosaic_0001>

<llo_original>
// kernel: tpu_custom_call.1
$region0: #{tpu_custom_call.1}
  #allocation0 [shape = 'u32[]', space=smem, size = 0x4, offset = 0x4, fixed_abs, tag = 'smem constant byte address 0x4 - core index']
  #allocation1 [shape = 'u32[144,128]{1,0:T(1,128)}', space=vmem, size = 0x12000, scoped, tag = 'internal scratch']
  %s0 = inlined_call_operand.hbm [shape: f32[64,384], index: 0, kind: input, shape index: {}]
  %s1 = inlined_call_operand.hbm [shape: f32[384,256], index: 1, kind: input, shape index: {}]
  %s2 = inlined_call_operand.vmem [shape: f32[1,256], index: 2, kind: input, shape index: {}]
  %s3 = inlined_call_operand.hbm [shape: f32[256,384], index: 3, kind: input, shape index: {}]
  %s4 = inlined_call_operand.vmem [shape: f32[1,384], index: 4, kind: input, shape index: {}]
  %s5 = inlined_call_operand.hbm [shape: f32[64,384], index: 5, kind: output, shape index: {}]
  %s6 = sld [smem:[#allocation0]]
  $region65: #{tpu_custom_call.1} parent=0
    _
  %s8 = ssub.s32 1, %s6
  %s9 = scalar_select 0, %s8, %s6
  $region1: #{tpu_custom_call.1} parent=0
    #allocation2 [shape = 'u8[98304]{0}', space=vmem, size = 0x18000, scoped, tag = 'input window, operand 0']
    #allocation3 [shape = 's32[2]{0}', space=sflag, size = 0x8, scoped, tag = 'scoped memory for tpu_custom_call.1']
    #allocation4 [shape = 's32[2]{0}', space=sflag, size = 0x8, scoped, tag = 'scoped memory for tpu_custom_call.1']
    #allocation5 [shape = 'u8[393216]{0}', space=vmem, size = 0x60000, scoped, tag = 'input window, operand 1, single buffered']
    #allocation6 [shape = 's32[1]{0}', space=sflag, size = 0x4, scoped, tag = 'scoped memory for tpu_custom_call.1']
    #allocation7 [shape = 'u8[393216]{0}', space=vmem, size = 0x60000, scoped, tag = 'input window, operand 3, single buffered']
    #allocation8 [shape = 'u8[98304]{0}', space=vmem, size = 0x18000, scoped, tag = 'output window, operand 0']
    %10 = vsyncpa [#allocation3], 0
    %s11 = scalar_lea.sflag [#allocation3], 1
    %12 = vsyncpa %s11, 0
    %13 = vsyncpa [#allocation6], 0
    %14 = vsyncpa [#allocation4], 0
    %s15 = scalar_lea.sflag [#allocation4], 1
    %16 = vsyncpa %s15, 0
    loop: start=0, step=1, limit=4
    $region2: #{tpu_custom_call.1} parent=1 // loop_pre_header
      _
    $region3: #{tpu_custom_call.1} parent=1 // loop_header
      %s18 = sphi 0, %s22
      %p19 = scmp.ge.s32.totalorder %s18, 4
      %s28 = sphi 0, %s30
      %s31 = sphi 0, %s28
      %s32 = sphi 0, %s31
      %s48 = sphi 0, %s32
      %s52 = sphi 0, %s52
      %s54 = sphi 0, %s52
      %s55 = sphi 0, %s54
      %s69 = sphi 0, %s55
      %s73 = sphi 0, %s73
      %s75 = sphi 0, %s73
      %s76 = sphi 0, %s75
      %s90 = sphi 0, %s76
      %s94 = sphi 0, %s94
      %s96 = sphi 0, %s94
      %s97 = sphi 0, %s96
      %s111 = sphi 0, %s97
      %s115 = sphi 0, %s115
      %s117 = sphi 0, %s115
      %s118 = sphi 0, %s117
      %s132 = sphi 0, %s118
      %s138 = sphi 0, %s140
      %s141 = sphi 0, %s138
      %s142 = sphi 0, %s141
      %s158 = sphi 0, %s142
    $region4: #{tpu_custom_call.1} parent=1 // loop_header_branch
      %21 = sbr.rel (%p19) target = $region8
    $region5: #{tpu_custom_call.1} parent=1 // loop_body
      %s23 = ssub.s32 %s18, 1
      %s24 = ssub.s32 %s18, 2
      %s25 = sadd.s32 %s18, 1
      %s26 = ssub.s32 %s18, %s25
      %p27 = scmp.eq.s32.totalorder %s26, 0
      %s29 = sadd.s32 %s28, 1
      %s30 = scalar_select %p27, %s28, %s29
      %p33 = pneg %p27
      %p34 = scmp.eq.s32.totalorder %s18, 1
      %p35 = por %p33, %p34
      %p36 = scmp.ne.s32.totalorder %s28, %s31
      %p37 = scmp.eq.s32.totalorder %s18, 0
      %p38 = por %p36, %p37
      %p39 = scmp.ne.s32.totalorder %s28, %s31
      %p40 = scmp.eq.s32.totalorder %s23, 1
      %p41 = por %p39, %p40
      %p42 = scmp.ne.s32.totalorder %s31, %s32
      %p43 = scmp.eq.s32.totalorder %s23, 0
      %p44 = por %p42, %p43
      %p45 = scmp.ne.s32.totalorder %s31, %s32
      %p46 = scmp.eq.s32.totalorder %s24, 1
      %p47 = por %p45, %p46
      %p49 = scmp.ne.s32.totalorder %s32, %s48
      %p50 = scmp.eq.s32.totalorder %s24, 0
      %p51 = por %p49, %p50
      %s53 = sadd.s32 %s52, 1
      %p56 = scmp.eq.s32.totalorder %s18, 1
      %p57 = scmp.ne.s32.totalorder %s52, %s54
      %p58 = scmp.eq.s32.totalorder %s18, 0
      %p59 = por %p57, %p58
      %p60 = scmp.ne.s32.totalorder %s52, %s54
      %p61 = scmp.eq.s32.totalorder %s23, 1
      %p62 = por %p60, %p61
      %p63 = scmp.ne.s32.totalorder %s54, %s55
      %p64 = scmp.eq.s32.totalorder %s23, 0
      %p65 = por %p63, %p64
      %p66 = scmp.ne.s32.totalorder %s54, %s55
      %p67 = scmp.eq.s32.totalorder %s24, 1
      %p68 = por %p66, %p67
      %p70 = scmp.ne.s32.totalorder %s55, %s69
      %p71 = scmp.eq.s32.totalorder %s24, 0
      %p72 = por %p70, %p71
      %s74 = sadd.s32 %s73, 1
      %p77 = scmp.eq.s32.totalorder %s18, 1
      %p78 = scmp.ne.s32.totalorder %s73, %s75
      %p79 = scmp.eq.s32.totalorder %s18, 0
      %p80 = por %p78, %p79
      %p81 = scmp.ne.s32.totalorder %s73, %s75
      %p82 = scmp.eq.s32.totalorder %s23, 1
      %p83 = por %p81, %p82
      %p84 = scmp.ne.s32.totalorder %s75, %s76
      %p85 = scmp.eq.s32.totalorder %s23, 0
      %p86 = por %p84, %p85
      %p87 = scmp.ne.s32.totalorder %s75, %s76
      %p88 = scmp.eq.s32.totalorder %s24, 1
      %p89 = por %p87, %p88
      %p91 = scmp.ne.s32.totalorder %s76, %s90
      %p92 = scmp.eq.s32.totalorder %s24, 0
      %p93 = por %p91, %p92
      %s95 = sadd.s32 %s94, 1
      %p98 = scmp.eq.s32.totalorder %s18, 1
      %p99 = scmp.ne.s32.totalorder %s94, %s96
      %p100 = scmp.eq.s32.totalorder %s18, 0
      %p101 = por %p99, %p100
      %p102 = scmp.ne.s32.totalorder %s94, %s96
      %p103 = scmp.eq.s32.totalorder %s23, 1
      %p104 = por %p102, %p103
      %p105 = scmp.ne.s32.totalorder %s96, %s97
      %p106 = scmp.eq.s32.totalorder %s23, 0
      %p107 = por %p105, %p106
      %p108 = scmp.ne.s32.totalorder %s96, %s97
      %p109 = scmp.eq.s32.totalorder %s24, 1
      %p110 = por %p108, %p109
      %p112 = scmp.ne.s32.totalorder %s97, %s111
      %p113 = scmp.eq.s32.totalorder %s24, 0
      %p114 = por %p112, %p113
      %s116 = sadd.s32 %s115, 1
      %p119 = scmp.eq.s32.totalorder %s18, 1
      %p120 = scmp.ne.s32.totalorder %s115, %s117
      %p121 = scmp.eq.s32.totalorder %s18, 0
      %p122 = por %p120, %p121
      %p123 = scmp.ne.s32.totalorder %s115, %s117
      %p124 = scmp.eq.s32.totalorder %s23, 1
      %p125 = por %p123, %p124
      %p126 = scmp.ne.s32.totalorder %s117, %s118
      %p127 = scmp.eq.s32.totalorder %s23, 0
      %p128 = por %p126, %p127
      %p129 = scmp.ne.s32.totalorder %s117, %s118
      %p130 = scmp.eq.s32.totalorder %s24, 1
      %p131 = por %p129, %p130
      %p133 = scmp.ne.s32.totalorder %s118, %s132
      %p134 = scmp.eq.s32.totalorder %s24, 0
      %p135 = por %p133, %p134
      %s136 = ssub.s32 %s18, %s25
      %p137 = scmp.eq.s32.totalorder %s136, 0
      %s139 = sadd.s32 %s138, 1
      %s140 = scalar_select %p137, %s138, %s139
      %p143 = pneg %p137
      %p144 = scmp.eq.s32.totalorder %s18, 1
      %p145 = por %p143, %p144
      %p146 = scmp.ne.s32.totalorder %s138, %s141
      %p147 = scmp.eq.s32.totalorder %s18, 0
      %p148 = por %p146, %p147
      %p149 = scmp.ne.s32.totalorder %s138, %s141
      %p150 = scmp.eq.s32.totalorder %s23, 1
      %p151 = por %p149, %p150
      %p152 = scmp.ne.s32.totalorder %s141, %s142
      %p153 = scmp.eq.s32.totalorder %s23, 0
      %p154 = por %p152, %p153
      %p155 = scmp.ne.s32.totalorder %s141, %s142
      %p156 = scmp.eq.s32.totalorder %s24, 1
      %p157 = por %p155, %p156
      %p159 = scmp.ne.s32.totalorder %s142, %s158
      %p160 = scmp.eq.s32.totalorder %s24, 0
      %p161 = por %p159, %p160
      %p162 = scmp.le.s32.totalorder 1, %s18
      %p163 = scmp.lt.s32.totalorder %s18, 3
      %p164 = pnand %p162, %p163
      %p165 = pneg %p164
      // Predicated region
      $region9: #{tpu_custom_call.1} parent=5 // pred_check
        _
      $region10: #{tpu_custom_call.1} parent=5 // pred_check_branch
        %167 = sbr.rel (%p164) target = $region12
      $region11: #{tpu_custom_call.1} parent=5 // pred_region
        %s168 = ssub.s32 %s18, 1
        // Predicated region
        $region13: #{tpu_custom_call.1} parent=11 // pred_check
          %p169 = pneg %p65
        $region14: #{tpu_custom_call.1} parent=11 // pred_check_branch
          %171 = sbr.rel (%p169) target = $region16
        $region15: #{tpu_custom_call.1} parent=11 // pred_region
          %s173 = ssub.s32 12288, 12288
          %174 = vsyncadd [#allocation6], %s173
          %s175 = sshll.u32 [#allocation5], 4
          %s176 = int_to_ptr.vmem [resolvable:$true] %s175
          %181 = dma.hbm_to_vmem [thread:$0]  %s1, 12288, %s176, [#allocation6], 256, 256, 16
        $region16: #{tpu_custom_call.1} parent=11 // pred_fallthru
          _
        // Predicated region
        $region17: #{tpu_custom_call.1} parent=11 // pred_check
          %p182 = pneg %p86
        $region18: #{tpu_custom_call.1} parent=11 // pred_check_branch
          %184 = sbr.rel (%p182) target = $region20
        $region19: #{tpu_custom_call.1} parent=11 // pred_region
          _
        $region20: #{tpu_custom_call.1} parent=11 // pred_fallthru
          _
        // Predicated region
        $region21: #{tpu_custom_call.1} parent=11 // pred_check
          %p185 = pneg %p107
        $region22: #{tpu_custom_call.1} parent=11 // pred_check_branch
          %187 = sbr.rel (%p185) target = $region24
        $region23: #{tpu_custom_call.1} parent=11 // pred_region
          %s189 = ssub.s32 12288, 12288
          %190 = vsyncadd [#allocation6], %s189
          %s191 = sshll.u32 [#allocation7], 4
          %s192 = int_to_ptr.vmem [resolvable:$true] %s191
          %197 = dma.hbm_to_vmem [thread:$0]  %s3, 12288, %s192, [#allocation6], 384, 384, 24
        $region24: #{tpu_custom_call.1} parent=11 // pred_fallthru
          _
        // Predicated region
        $region25: #{tpu_custom_call.1} parent=11 // pred_check
          %p198 = pneg %p128
        $region26: #{tpu_custom_call.1} parent=11 // pred_check_branch
          %200 = sbr.rel (%p198) target = $region28
        $region27: #{tpu_custom_call.1} parent=11 // pred_region
          _
        $region28: #{tpu_custom_call.1} parent=11 // pred_fallthru
          _
      $region12: #{tpu_custom_call.1} parent=5 // pred_fallthru
        _
      %p201 = scmp.lt.s32.totalorder %s18, 2
      // Predicated region
      $region29: #{tpu_custom_call.1} parent=5 // pred_check
        %p202 = pneg %p201
      $region30: #{tpu_custom_call.1} parent=5 // pred_check_branch
        %204 = sbr.rel (%p202) target = $region32
      $region31: #{tpu_custom_call.1} parent=5 // pred_region
        // Predicated region
        $region33: #{tpu_custom_call.1} parent=31 // pred_check
          %p205 = pneg %p38
        $region34: #{tpu_custom_call.1} parent=31 // pred_check_branch
          %207 = sbr.rel (%p205) target = $region36
        $region35: #{tpu_custom_call.1} parent=31 // pred_region
          %s208 = sand.u32 %s28, 1
          %s209 = scalar_lea.sflag [#allocation3], %s208
          %s210 = sand.u32 %s28, 1
          %s211 = smul.addr %s210, 96
          %s212 = scalar_lea.vmem [#allocation2], %s211
          %s213 = smul.u32 4, %s18
          %s215 = ssub.s32 1536, 1536
          %216 = vsyncadd %s209, %s215
          %s217 = smul.addr %s213, 3
          %s218 = smul.addr %s217, 128
          %s219 = scalar_lea.hbm %s0, %s218
          %s220 = sshll.u32 %s212, 4
          %s221 = int_to_ptr.vmem [resolvable:$true] %s220
          %226 = dma.hbm_to_vmem [thread:$0]  %s219, 1536, %s221, %s209, 384, 384, 24
        $region36: #{tpu_custom_call.1} parent=31 // pred_fallthru
          _
      $region32: #{tpu_custom_call.1} parent=5 // pred_fallthru
        _
      %p227 = scmp.le.s32.totalorder 1, %s18
      %p228 = scmp.lt.s32.totalorder %s18, 3
      %p229 = pnand %p227, %p228
      %p230 = pneg %p229
      // Predicated region
      $region37: #{tpu_custom_call.1} parent=5 // pred_check
        _
      $region38: #{tpu_custom_call.1} parent=5 // pred_check_branch
        %232 = sbr.rel (%p229) target = $region40
      $region39: #{tpu_custom_call.1} parent=5 // pred_region
        %s233 = ssub.s32 %s18, 1
        %s234 = sand.u32 %s31, 1
        %s235 = scalar_lea.sflag [#allocation3], %s234
        %s236 = sand.u32 %s31, 1
        %s237 = smul.addr %s236, 96
        %s238 = scalar_lea.vmem [#allocation2], %s237
        // Predicated region
        $region41: #{tpu_custom_call.1} parent=39 // pred_check
          %p239 = pneg %p44
        $region42: #{tpu_custom_call.1} parent=39 // pred_check_branch
          %241 = sbr.rel (%p239) target = $region44
        $region43: #{tpu_custom_call.1} parent=39 // pred_region
          %242 = dma.done %s235, 1536
        $region44: #{tpu_custom_call.1} parent=39 // pred_fallthru
          _
        // Predicated region
        $region45: #{tpu_custom_call.1} parent=39 // pred_check
          %p243 = pneg %p65
        $region46: #{tpu_custom_call.1} parent=39 // pred_check_branch
          %245 = sbr.rel (%p243) target = $region48
        $region47: #{tpu_custom_call.1} parent=39 // pred_region
          %246 = dma.done [#allocation6], 12288
        $region48: #{tpu_custom_call.1} parent=39 // pred_fallthru
          _
        // Predicated region
        $region49: #{tpu_custom_call.1} parent=39 // pred_check
          %p247 = pneg %p107
        $region50: #{tpu_custom_call.1} parent=39 // pred_check_branch
          %249 = sbr.rel (%p247) target = $region52
        $region51: #{tpu_custom_call.1} parent=39 // pred_region
          %250 = dma.done [#allocation6], 12288
        $region52: #{tpu_custom_call.1} parent=39 // pred_fallthru
          _
        %s251 = sand.u32 %s31, 1
        %s252 = scalar_lea.sflag [#allocation3], %s251
        %s253 = sand.u32 %s31, 1
        %s254 = smul.addr %s253, 96
        %s255 = scalar_lea.vmem [#allocation2], %s254
        %p256 = pneg %p44
        %p257 = pneg %p41
        %p258 = pneg %p65
        %p259 = pneg %p62
        %p260 = pneg %p86
        %p261 = pneg %p83
        %p262 = pneg %p107
        %p263 = pneg %p104
        %p264 = pneg %p128
        %p265 = pneg %p125
        %p266 = pneg %p154
        %p267 = pneg %p151
        %s268 = sand.u32 %s141, 1
        %s269 = scalar_lea.sflag [#allocation4], %s268
        %s270 = sand.u32 %s141, 1
        %s271 = smul.addr %s270, 96
        %s272 = scalar_lea.vmem [#allocation8], %s271
        %s273 = smul.u32 4, %s23
        %s274 = smul.u32 4, %s23
        %v275 = vld [vmem:[%s238] sm:$0xff]
        %v276 = vld [vmem:[%s238 + $0x8] sm:$0xff]
        %v277 = vld [vmem:[%s238 + $0x10] sm:$0xff]
        %v278 = vld [vmem:[%s238 + $0x18] sm:$0xff]
        %v279 = vld [vmem:[%s238 + $0x20] sm:$0xff]
        %v280 = vld [vmem:[%s238 + $0x28] sm:$0xff]
        %v281 = vld [vmem:[%s238 + $0x30] sm:$0xff]
        %v282 = vld [vmem:[%s238 + $0x38] sm:$0xff]
        %v283 = vld [vmem:[%s238 + $0x40] sm:$0xff]
        %v284 = vld [vmem:[%s238 + $0x48] sm:$0xff]
        %v285 = vld [vmem:[%s238 + $0x50] sm:$0xff]
        %v286 = vld [vmem:[%s238 + $0x58] sm:$0xff]
        %v287 = vld [vmem:[#allocation5] sm:$0xff]
        %v288 = vld [vmem:[#allocation5 + $0x8] sm:$0xff]
        %v289 = vld [vmem:[#allocation5 + $0x10] sm:$0xff]
        %v290 = vld [vmem:[#allocation5 + $0x18] sm:$0xff]
        %v291 = vld [vmem:[#allocation5 + $0x20] sm:$0xff]
        %v292 = vld [vmem:[#allocation5 + $0x28] sm:$0xff]
        %v293 = vld [vmem:[#allocation5 + $0x30] sm:$0xff]
        %v294 = vld [vmem:[#allocation5 + $0x38] sm:$0xff]
        %v295 = vld [vmem:[#allocation5 + $0x40] sm:$0xff]
        %v296 = vld [vmem:[#allocation5 + $0x48] sm:$0xff]
        %v297 = vld [vmem:[#allocation5 + $0x50] sm:$0xff]
        %v298 = vld [vmem:[#allocation5 + $0x58] sm:$0xff]
        %v299 = vld [vmem:[#allocation5 + $0x60] sm:$0xff]
        %v300 = vld [vmem:[#allocation5 + $0x68] sm:$0xff]
        %v301 = vld [vmem:[#allocation5 + $0x70] sm:$0xff]
        %v302 = vld [vmem:[#allocation5 + $0x78] sm:$0xff]
        %v303 = vld [vmem:[#allocation5 + $0x80] sm:$0xff]
        %v304 = vld [vmem:[#allocation5 + $0x88] sm:$0xff]
        %v305 = vld [vmem:[#allocation5 + $0x90] sm:$0xff]
        %v306 = vld [vmem:[#allocation5 + $0x98] sm:$0xff]
        %v307 = vld [vmem:[#allocation5 + $0xa0] sm:$0xff]
        %v308 = vld [vmem:[#allocation5 + $0xa8] sm:$0xff]
        %v309 = vld [vmem:[#allocation5 + $0xb0] sm:$0xff]
        %v310 = vld [vmem:[#allocation5 + $0xb8] sm:$0xff]
        %v311 = vld [vmem:[#allocation5 + $0xc0] sm:$0xff]
        %v312 = vld [vmem:[#allocation5 + $0xc8] sm:$0xff]
        %v313 = vld [vmem:[#allocation5 + $0xd0] sm:$0xff]
        %v314 = vld [vmem:[#allocation5 + $0xd8] sm:$0xff]
        %v315 = vld [vmem:[#allocation5 + $0xe0] sm:$0xff]
        %v316 = vld [vmem:[#allocation5 + $0xe8] sm:$0xff]
        %v317 = vld [vmem:[#allocation5 + $0xf0] sm:$0xff]
        %v318 = vld [vmem:[#allocation5 + $0xf8] sm:$0xff]
        %v319 = vld [vmem:[#allocation5 + $0x100] sm:$0xff]
        %v320 = vld [vmem:[#allocation5 + $0x108] sm:$0xff]
        %v321 = vld [vmem:[#allocation5 + $0x110] sm:$0xff]
        %v322 = vld [vmem:[#allocation5 + $0x118] sm:$0xff]
        %v323 = vld [vmem:[#allocation5 + $0x120] sm:$0xff]
        %v324 = vld [vmem:[#allocation5 + $0x128] sm:$0xff]
        %v325 = vld [vmem:[#allocation5 + $0x130] sm:$0xff]
        %v326 = vld [vmem:[#allocation5 + $0x138] sm:$0xff]
        %v327 = vld [vmem:[#allocation5 + $0x140] sm:$0xff]
        %v328 = vld [vmem:[#allocation5 + $0x148] sm:$0xff]
        %v329 = vld [vmem:[#allocation5 + $0x150] sm:$0xff]
        %v330 = vld [vmem:[#allocation5 + $0x158] sm:$0xff]
        %v331 = vld [vmem:[#allocation5 + $0x160] sm:$0xff]
        %v332 = vld [vmem:[#allocation5 + $0x168] sm:$0xff]
        %v333 = vld [vmem:[#allocation5 + $0x170] sm:$0xff]
        %v334 = vld [vmem:[#allocation5 + $0x178] sm:$0xff]
        %v335 = vld [vmem:[#allocation5 + $0x180] sm:$0xff]
        %v336 = vld [vmem:[#allocation5 + $0x188] sm:$0xff]
        %v337 = vld [vmem:[#allocation5 + $0x190] sm:$0xff]
        %v338 = vld [vmem:[#allocation5 + $0x198] sm:$0xff]
        %v339 = vld [vmem:[#allocation5 + $0x1a0] sm:$0xff]
        %v340 = vld [vmem:[#allocation5 + $0x1a8] sm:$0xff]
        %v341 = vld [vmem:[#allocation5 + $0x1b0] sm:$0xff]
        %v342 = vld [vmem:[#allocation5 + $0x1b8] sm:$0xff]
        %v343 = vld [vmem:[#allocation5 + $0x1c0] sm:$0xff]
        %v344 = vld [vmem:[#allocation5 + $0x1c8] sm:$0xff]
        %v345 = vld [vmem:[#allocation5 + $0x1d0] sm:$0xff]
        %v346 = vld [vmem:[#allocation5 + $0x1d8] sm:$0xff]
        %v347 = vld [vmem:[#allocation5 + $0x1e0] sm:$0xff]
        %v348 = vld [vmem:[#allocation5 + $0x1e8] sm:$0xff]
        %v349 = vld [vmem:[#allocation5 + $0x1f0] sm:$0xff]
        %v350 = vld [vmem:[#allocation5 + $0x1f8] sm:$0xff]
        %v351 = vld [vmem:[#allocation5 + $0x200] sm:$0xff]
        %v352 = vld [vmem:[#allocation5 + $0x208] sm:$0xff]
        %v353 = vld [vmem:[#allocation5 + $0x210] sm:$0xff]
        %v354 = vld [vmem:[#allocation5 + $0x218] sm:$0xff]
        %v355 = vld [vmem:[#allocation5 + $0x220] sm:$0xff]
        %v356 = vld [vmem:[#allocation5 + $0x228] sm:$0xff]
        %v357 = vld [vmem:[#allocation5 + $0x230] sm:$0xff]
        %v358 = vld [vmem:[#allocation5 + $0x238] sm:$0xff]
        %v359 = vld [vmem:[#allocation5 + $0x240] sm:$0xff]
        %v360 = vld [vmem:[#allocation5 + $0x248] sm:$0xff]
        %v361 = vld [vmem:[#allocation5 + $0x250] sm:$0xff]
        %v362 = vld [vmem:[#allocation5 + $0x258] sm:$0xff]
        %v363 = vld [vmem:[#allocation5 + $0x260] sm:$0xff]
        %v364 = vld [vmem:[#allocation5 + $0x268] sm:$0xff]
        %v365 = vld [vmem:[#allocation5 + $0x270] sm:$0xff]
        %v366 = vld [vmem:[#allocation5 + $0x278] sm:$0xff]
        %v367 = vld [vmem:[#allocation5 + $0x280] sm:$0xff]
        %v368 = vld [vmem:[#allocation5 + $0x288] sm:$0xff]
        %v369 = vld [vmem:[#allocation5 + $0x290] sm:$0xff]
        %v370 = vld [vmem:[#allocation5 + $0x298] sm:$0xff]
        %v371 = vld [vmem:[#allocation5 + $0x2a0] sm:$0xff]
        %v372 = vld [vmem:[#allocation5 + $0x2a8] sm:$0xff]
        %v373 = vld [vmem:[#allocation5 + $0x2b0] sm:$0xff]
        %v374 = vld [vmem:[#allocation5 + $0x2b8] sm:$0xff]
        %v375 = vld [vmem:[#allocation5 + $0x2c0] sm:$0xff]
        %v376 = vld [vmem:[#allocation5 + $0x2c8] sm:$0xff]
        %v377 = vld [vmem:[#allocation5 + $0x2d0] sm:$0xff]
        %v378 = vld [vmem:[#allocation5 + $0x2d8] sm:$0xff]
        %v379 = vld [vmem:[#allocation5 + $0x2e0] sm:$0xff]
        %v380 = vld [vmem:[#allocation5 + $0x2e8] sm:$0xff]
        %v381 = vld [vmem:[#allocation5 + $0x2f0] sm:$0xff]
        %v382 = vld [vmem:[#allocation5 + $0x2f8] sm:$0xff]
        %v383 = vld [vmem:[%s2] sm:$0x3]
        %v385 = vlaneseq
        %v386 = vshrl.u32 %v385, 7
        %v387 = vsub.s32 0, %v386
        %v388 = vrot.slane %v383, %v387
        %v389 = vlaneseq
        %v390 = vshrl.u32 %v389, 7
        %v391 = vsub.s32 1, %v390
        %v392 = vrot.slane %v383, %v391
        %395 = vmatprep.subr.mxu0 %v288
        %396 = vmatpush1.msra.mxu0 %v287
        %397 = vmatprep.subr.mxu0 %v290
        %398 = vmatpush1.msra.mxu0 %v289
        %399 = vmatprep.subr.mxu0 %v292
        %400 = vmatpush1.msra.mxu0 %v291
        %401 = vmatprep.subr.mxu0 %v294
        %402 = vmatpush1.msra.mxu0 %v293
        %403 = vmatprep.subr.mxu0 %v296
        %404 = vmatpush1.msra.mxu0 %v295
        %405 = vmatprep.subr.mxu0 %v298
        %406 = vmatpush1.msra.mxu0 %v297
        %407 = vmatprep.subr.mxu0 %v300
        %408 = vmatpush1.msra.mxu0 %v299
        %409 = vmatprep.subr.mxu0 %v302
        %410 = vmatpush1.msra.mxu0 %v301
        %411 = vmatprep.subr.mxu0 %v304
        %412 = vmatpush1.msra.mxu0 %v303
        %413 = vmatprep.subr.mxu0 %v306
        %414 = vmatpush1.msra.mxu0 %v305
        %415 = vmatprep.subr.mxu0 %v308
        %416 = vmatpush1.msra.mxu0 %v307
        %417 = vmatprep.subr.mxu0 %v310
        %418 = vmatpush1.msra.mxu0 %v309
        %419 = vmatprep.subr.mxu0 %v312
        %420 = vmatpush1.msra.mxu0 %v311
        %421 = vmatprep.subr.mxu0 %v314
        %422 = vmatpush1.msra.mxu0 %v313
        %423 = vmatprep.subr.mxu0 %v316
        %424 = vmatpush1.msra.mxu0 %v315
        %425 = vmatprep.subr.mxu0 %v318
        %426 = vmatpush1.msra.mxu0 %v317
        %427 = vmatprep.subr.mxu0 %v320
        %428 = vmatpush1.msra.mxu0 %v319
        %429 = vmatprep.subr.mxu0 %v322
        %430 = vmatpush1.msra.mxu0 %v321
        %431 = vmatprep.subr.mxu0 %v324
        %432 = vmatpush1.msra.mxu0 %v323
        %433 = vmatprep.subr.mxu0 %v326
        %434 = vmatpush1.msra.mxu0 %v325
        %435 = vmatprep.subr.mxu0 %v328
        %436 = vmatpush1.msra.mxu0 %v327
        %437 = vmatprep.subr.mxu0 %v330
        %438 = vmatpush1.msra.mxu0 %v329
        %439 = vmatprep.subr.mxu0 %v332
        %440 = vmatpush1.msra.mxu0 %v331
        %441 = vmatprep.subr.mxu0 %v334
        %442 = vmatpush1.msra.mxu0 %v333
        %443 = vmatprep.subr.mxu0 %v336
        %444 = vmatpush1.msra.mxu0 %v335
        %445 = vmatprep.subr.mxu0 %v338
        %446 = vmatpush1.msra.mxu0 %v337
        %447 = vmatprep.subr.mxu0 %v340
        %448 = vmatpush1.msra.mxu0 %v339
        %449 = vmatprep.subr.mxu0 %v342
        %450 = vmatpush1.msra.mxu0 %v341
        %451 = vmatprep.subr.mxu0 %v344
        %452 = vmatpush1.msra.mxu0 %v343
        %453 = vmatprep.subr.mxu0 %v346
        %454 = vmatpush1.msra.mxu0 %v345
        %455 = vmatprep.subr.mxu0 %v348
        %456 = vmatpush1.msra.mxu0 %v347
        %457 = vmatprep.subr.mxu0 %v350
        %458 = vmatpush1.msra.mxu0 %v349
        %459 = vmatprep.mubr.f32.mxu0 %v276
        %460 = vmatmul.mubr.f32.gmra.mrb[0].mxu0 %v275
        %v461 = vpop.f32.mrb[0].mxu0
        %v462 = vadd.f32 %v388, %v461
        %v463 = vpop.f32.mrb[0].mxu0
        %v464 = vadd.f32 %v392, %v463
        %465 = vmatprep.mubr.f32.mxu0 %v279
        %466 = vmatmul.mubr.f32.gmra.mrb[0].mxu0 %v278
        %v467 = vpop.f32.mrb[0].mxu0
        %v468 = vadd.f32 %v388, %v467
        %v469 = vpop.f32.mrb[0].mxu0
        %v470 = vadd.f32 %v392, %v469
        %471 = vmatprep.mubr.f32.mxu0 %v282
        %472 = vmatmul.mubr.f32.gmra.mrb[0].mxu0 %v281
        %v473 = vpop.f32.mrb[0].mxu0
        %v474 = vadd.f32 %v388, %v473
        %v475 = vpop.f32.mrb[0].mxu0
        %v476 = vadd.f32 %v392, %v475
        %477 = vmatprep.mubr.f32.mxu0 %v285
        %478 = vmatmul.mubr.f32.gmra.mrb[0].mxu0 %v284
        %v479 = vpop.f32.mrb[0].mxu0
        %v480 = vadd.f32 %v388, %v479
        %v481 = vpop.f32.mrb[0].mxu0
        %v482 = vadd.f32 %v392, %v481
        %483 = vdwg.mxu0
        %484 = vmatprep.subr.mxu0 %v352
        %485 = vmatpush1.msra.mxu0 %v351
        %486 = vmatprep.subr.mxu0 %v354
        %487 = vmatpush1.msra.mxu0 %v353
        %488 = vmatprep.subr.mxu0 %v356
        %489 = vmatpush1.msra.mxu0 %v355
        %490 = vmatprep.subr.mxu0 %v358
        %491 = vmatpush1.msra.mxu0 %v357
        %492 = vmatprep.subr.mxu0 %v360
        %493 = vmatpush1.msra.mxu0 %v359
        %494 = vmatprep.subr.mxu0 %v362
        %495 = vmatpush1.msra.mxu0 %v361
        %496 = vmatprep.subr.mxu0 %v364
        %497 = vmatpush1.msra.mxu0 %v363
        %498 = vmatprep.subr.mxu0 %v366
        %499 = vmatpush1.msra.mxu0 %v365
        %500 = vmatprep.subr.mxu0 %v368
        %501 = vmatpush1.msra.mxu0 %v367
        %502 = vmatprep.subr.mxu0 %v370
        %503 = vmatpush1.msra.mxu0 %v369
        %504 = vmatprep.subr.mxu0 %v372
        %505 = vmatpush1.msra.mxu0 %v371
        %506 = vmatprep.subr.mxu0 %v374
        %507 = vmatpush1.msra.mxu0 %v373
        %508 = vmatprep.subr.mxu0 %v376
        %509 = vmatpush1.msra.mxu0 %v375
        %510 = vmatprep.subr.mxu0 %v378
        %511 = vmatpush1.msra.mxu0 %v377
        %512 = vmatprep.subr.mxu0 %v380
        %513 = vmatpush1.msra.mxu0 %v379
        %514 = vmatprep.subr.mxu0 %v382
        %515 = vmatpush1.msra.mxu0 %v381
        %516 = vmatprep.subr.mxu0 0.0
        %517 = vmatpush1.msra.mxu0 0.0
        %518 = vmatprep.subr.mxu0 0.0
        %519 = vmatpush1.msra.mxu0 0.0
        %520 = vmatprep.subr.mxu0 0.0
        %521 = vmatpush1.msra.mxu0 0.0
        %522 = vmatprep.subr.mxu0 0.0
        %523 = vmatpush1.msra.mxu0 0.0
        %524 = vmatprep.subr.mxu0 0.0
        %525 = vmatpush1.msra.mxu0 0.0
        %526 = vmatprep.subr.mxu0 0.0
        %527 = vmatpush1.msra.mxu0 0.0
        %528 = vmatprep.subr.mxu0 0.0
        %529 = vmatpush1.msra.mxu0 0.0
        %530 = vmatprep.subr.mxu0 0.0
        %531 = vmatpush1.msra.mxu0 0.0
        %532 = vmatprep.subr.mxu0 0.0
        %533 = vmatpush1.msra.mxu0 0.0
        %534 = vmatprep.subr.mxu0 0.0
        %535 = vmatpush1.msra.mxu0 0.0
        %536 = vmatprep.subr.mxu0 0.0
        %537 = vmatpush1.msra.mxu0 0.0
        %538 = vmatprep.subr.mxu0 0.0
        %539 = vmatpush1.msra.mxu0 0.0
        %540 = vmatprep.subr.mxu0 0.0
        %541 = vmatpush1.msra.mxu0 0.0
        %542 = vmatprep.subr.mxu0 0.0
        %543 = vmatpush1.msra.mxu0 0.0
        %544 = vmatprep.subr.mxu0 0.0
        %545 = vmatpush1.msra.mxu0 0.0
        %546 = vmatprep.subr.mxu0 0.0
        %547 = vmatpush1.msra.mxu0 0.0
        %548 = vmatprep.mubr.f32.mxu0 0.0
        %549 = vmatmul.mubr.f32.gmra.mrb[0].mxu0 %v277
        %v550 = vpop.f32.mrb[0].mxu0
        %v551 = vadd.f32 %v462, %v550
        %v552 = vpop.f32.mrb[0].mxu0
        %v553 = vadd.f32 %v464, %v552
        %554 = vmatprep.mubr.f32.mxu0 0.0
        %555 = vmatmul.mubr.f32.gmra.mrb[0].mxu0 %v280
        %v556 = vpop.f32.mrb[0].mxu0
        %v557 = vadd.f32 %v468, %v556
        %v558 = vpop.f32.mrb[0].mxu0
        %v559 = vadd.f32 %v470, %v558
        %560 = vmatprep.mubr.f32.mxu0 0.0
        %561 = vmatmul.mubr.f32.gmra.mrb[0].mxu0 %v283
        %v562 = vpop.f32.mrb[0].mxu0
        %v563 = vadd.f32 %v474, %v562
        %v564 = vpop.f32.mrb[0].mxu0
        %v565 = vadd.f32 %v476, %v564
        %566 = vmatprep.mubr.f32.mxu0 0.0
        %567 = vmatmul.mubr.f32.gmra.mrb[0].mxu0 %v286
        %v568 = vpop.f32.mrb[0].mxu0
        %v569 = vadd.f32 %v480, %v568
        %v570 = vpop.f32.mrb[0].mxu0
        %v571 = vadd.f32 %v482, %v570
        %572 = vdwg.mxu0
        %v573 = vxor.u32 %v551, 2147483648
        %v574 = vxor.u32 %v553, 2147483648
        %v575 = vxor.u32 %v557, 2147483648
        %v576 = vxor.u32 %v559, 2147483648
        %v577 = vxor.u32 %v563, 2147483648
        %v578 = vxor.u32 %v565, 2147483648
        %v579 = vxor.u32 %v569, 2147483648
        %v580 = vxor.u32 %v571, 2147483648
        %v581 = vmul.f32 %v573, 1.442695
        %v582 = vpow.pop %v581
        %v583 = vmul.f32 %v574, 1.442695
        %v584 = vpow.pop %v583
        %v585 = vmul.f32 %v575, 1.442695
        %v586 = vpow.pop %v585
        %v587 = vmul.f32 %v576, 1.442695
        %v588 = vpow.pop %v587
        %v589 = vmul.f32 %v577, 1.442695
        %v590 = vpow.pop %v589
        %v591 = vmul.f32 %v578, 1.442695
        %v592 = vpow.pop %v591
        %v593 = vmul.f32 %v579, 1.442695
        %v594 = vpow.pop %v593
        %v595 = vmul.f32 %v580, 1.442695
        %v596 = vpow.pop %v595
        %v597 = vadd.f32 %v582, 1.0
        %v598 = vadd.f32 %v584, 1.0
        %v599 = vadd.f32 %v586, 1.0
        %v600 = vadd.f32 %v588, 1.0
        %v601 = vadd.f32 %v590, 1.0
        %v602 = vadd.f32 %v592, 1.0
        %v603 = vadd.f32 %v594, 1.0
        %v604 = vadd.f32 %v596, 1.0
        %v605 = vrcp.pop %v597
        %v606 = vmul.f32 1.0, %v605
        %v607 = vrcp.pop %v598
        %v608 = vmul.f32 1.0, %v607
        %v609 = vrcp.pop %v599
        %v610 = vmul.f32 1.0, %v609
        %v611 = vrcp.pop %v600
        %v612 = vmul.f32 1.0, %v611
        %v613 = vrcp.pop %v601
        %v614 = vmul.f32 1.0, %v613
        %v615 = vrcp.pop %v602
        %v616 = vmul.f32 1.0, %v615
        %v617 = vrcp.pop %v603
        %v618 = vmul.f32 1.0, %v617
        %v619 = vrcp.pop %v604
        %v620 = vmul.f32 1.0, %v619
        %v621 = vld [vmem:[#allocation7] sm:$0xff]
        %v622 = vld [vmem:[#allocation7 + $0x8] sm:$0xff]
        %v623 = vld [vmem:[#allocation7 + $0x10] sm:$0xff]
        %v624 = vld [vmem:[#allocation7 + $0x18] sm:$0xff]
        %v625 = vld [vmem:[#allocation7 + $0x20] sm:$0xff]
        %v626 = vld [vmem:[#allocation7 + $0x28] sm:$0xff]
        %v627 = vld [vmem:[#allocation7 + $0x30] sm:$0xff]
        %v628 = vld [vmem:[#allocation7 + $0x38] sm:$0xff]
        %v629 = vld [vmem:[#allocation7 + $0x40] sm:$0xff]
        %v630 = vld [vmem:[#allocation7 + $0x48] sm:$0xff]
        %v631 = vld [vmem:[#allocation7 + $0x50] sm:$0xff]
        %v632 = vld [vmem:[#allocation7 + $0x58] sm:$0xff]
        %v633 = vld [vmem:[#allocation7 + $0x60] sm:$0xff]
        %v634 = vld [vmem:[#allocation7 + $0x68] sm:$0xff]
        %v635 = vld [vmem:[#allocation7 + $0x70] sm:$0xff]
        %v636 = vld [vmem:[#allocation7 + $0x78] sm:$0xff]
        %v637 = vld [vmem:[#allocation7 + $0x80] sm:$0xff]
        %v638 = vld [vmem:[#allocation7 + $0x88] sm:$0xff]
        %v639 = vld [vmem:[#allocation7 + $0x90] sm:$0xff]
        %v640 = vld [vmem:[#allocation7 + $0x98] sm:$0xff]
        %v641 = vld [vmem:[#allocation7 + $0xa0] sm:$0xff]
        %v642 = vld [vmem:[#allocation7 + $0xa8] sm:$0xff]
        %v643 = vld [vmem:[#allocation7 + $0xb0] sm:$0xff]
        %v644 = vld [vmem:[#allocation7 + $0xb8] sm:$0xff]
        %v645 = vld [vmem:[#allocation7 + $0xc0] sm:$0xff]
        %v646 = vld [vmem:[#allocation7 + $0xc8] sm:$0xff]
        %v647 = vld [vmem:[#allocation7 + $0xd0] sm:$0xff]
        %v648 = vld [vmem:[#allocation7 + $0xd8] sm:$0xff]
        %v649 = vld [vmem:[#allocation7 + $0xe0] sm:$0xff]
        %v650 = vld [vmem:[#allocation7 + $0xe8] sm:$0xff]
        %v651 = vld [vmem:[#allocation7 + $0xf0] sm:$0xff]
        %v652 = vld [vmem:[#allocation7 + $0xf8] sm:$0xff]
        %v653 = vld [vmem:[#allocation7 + $0x100] sm:$0xff]
        %v654 = vld [vmem:[#allocation7 + $0x108] sm:$0xff]
        %v655 = vld [vmem:[#allocation7 + $0x110] sm:$0xff]
        %v656 = vld [vmem:[#allocation7 + $0x118] sm:$0xff]
        %v657 = vld [vmem:[#allocation7 + $0x120] sm:$0xff]
        %v658 = vld [vmem:[#allocation7 + $0x128] sm:$0xff]
        %v659 = vld [vmem:[#allocation7 + $0x130] sm:$0xff]
        %v660 = vld [vmem:[#allocation7 + $0x138] sm:$0xff]
        %v661 = vld [vmem:[#allocation7 + $0x140] sm:$0xff]
        %v662 = vld [vmem:[#allocation7 + $0x148] sm:$0xff]
        %v663 = vld [vmem:[#allocation7 + $0x150] sm:$0xff]
        %v664 = vld [vmem:[#allocation7 + $0x158] sm:$0xff]
        %v665 = vld [vmem:[#allocation7 + $0x160] sm:$0xff]
        %v666 = vld [vmem:[#allocation7 + $0x168] sm:$0xff]
        %v667 = vld [vmem:[#allocation7 + $0x170] sm:$0xff]
        %v668 = vld [vmem:[#allocation7 + $0x178] sm:$0xff]
        %v669 = vld [vmem:[#allocation7 + $0x180] sm:$0xff]
        %v670 = vld [vmem:[#allocation7 + $0x188] sm:$0xff]
        %v671 = vld [vmem:[#allocation7 + $0x190] sm:$0xff]
        %v672 = vld [vmem:[#allocation7 + $0x198] sm:$0xff]
        %v673 = vld [vmem:[#allocation7 + $0x1a0] sm:$0xff]
        %v674 = vld [vmem:[#allocation7 + $0x1a8] sm:$0xff]
        %v675 = vld [vmem:[#allocation7 + $0x1b0] sm:$0xff]
        %v676 = vld [vmem:[#allocation7 + $0x1b8] sm:$0xff]
        %v677 = vld [vmem:[#allocation7 + $0x1c0] sm:$0xff]
        %v678 = vld [vmem:[#allocation7 + $0x1c8] sm:$0xff]
        %v679 = vld [vmem:[#allocation7 + $0x1d0] sm:$0xff]
        %v680 = vld [vmem:[#allocation7 + $0x1d8] sm:$0xff]
        %v681 = vld [vmem:[#allocation7 + $0x1e0] sm:$0xff]
        %v682 = vld [vmem:[#allocation7 + $0x1e8] sm:$0xff]
        %v683 = vld [vmem:[#allocation7 + $0x1f0] sm:$0xff]
        %v684 = vld [vmem:[#allocation7 + $0x1f8] sm:$0xff]
        %v685 = vld [vmem:[#allocation7 + $0x200] sm:$0xff]
        %v686 = vld [vmem:[#allocation7 + $0x208] sm:$0xff]
        %v687 = vld [vmem:[#allocation7 + $0x210] sm:$0xff]
        %v688 = vld [vmem:[#allocation7 + $0x218] sm:$0xff]
        %v689 = vld [vmem:[#allocation7 + $0x220] sm:$0xff]
        %v690 = vld [vmem:[#allocation7 + $0x228] sm:$0xff]
        %v691 = vld [vmem:[#allocation7 + $0x230] sm:$0xff]
        %v692 = vld [vmem:[#allocation7 + $0x238] sm:$0xff]
        %v693 = vld [vmem:[#allocation7 + $0x240] sm:$0xff]
        %v694 = vld [vmem:[#allocation7 + $0x248] sm:$0xff]
        %v695 = vld [vmem:[#allocation7 + $0x250] sm:$0xff]
        %v696 = vld [vmem:[#allocation7 + $0x258] sm:$0xff]
        %v697 = vld [vmem:[#allocation7 + $0x260] sm:$0xff]
        %v698 = vld [vmem:[#allocation7 + $0x268] sm:$0xff]
        %v699 = vld [vmem:[#allocation7 + $0x270] sm:$0xff]
        %v700 = vld [vmem:[#allocation7 + $0x278] sm:$0xff]
        %v701 = vld [vmem:[#allocation7 + $0x280] sm:$0xff]
        %v702 = vld [vmem:[#allocation7 + $0x288] sm:$0xff]
        %v703 = vld [vmem:[#allocation7 + $0x290] sm:$0xff]
        %v704 = vld [vmem:[#allocation7 + $0x298] sm:$0xff]
        %v705 = vld [vmem:[#allocation7 + $0x2a0] sm:$0xff]
        %v706 = vld [vmem:[#allocation7 + $0x2a8] sm:$0xff]
        %v707 = vld [vmem:[#allocation7 + $0x2b0] sm:$0xff]
        %v708 = vld [vmem:[#allocation7 + $0x2b8] sm:$0xff]
        %v709 = vld [vmem:[#allocation7 + $0x2c0] sm:$0xff]
        %v710 = vld [vmem:[#allocation7 + $0x2c8] sm:$0xff]
        %v711 = vld [vmem:[#allocation7 + $0x2d0] sm:$0xff]
        %v712 = vld [vmem:[#allocation7 + $0x2d8] sm:$0xff]
        %v713 = vld [vmem:[#allocation7 + $0x2e0] sm:$0xff]
        %v714 = vld [vmem:[#allocation7 + $0x2e8] sm:$0xff]
        %v715 = vld [vmem:[#allocation7 + $0x2f0] sm:$0xff]
        %v716 = vld [vmem:[#allocation7 + $0x2f8] sm:$0xff]
        %v717 = vld [vmem:[%s4] sm:$0x7]
        %v719 = vlaneseq
        %v720 = vshrl.u32 %v719, 7
        %v721 = vsub.s32 0, %v720
        %v722 = vrot.slane %v717, %v721
        %v723 = vlaneseq
        %v724 = vshrl.u32 %v723, 7
        %v725 = vsub.s32 1, %v724
        %v726 = vrot.slane %v717, %v725
        %v727 = vlaneseq
        %v728 = vshrl.u32 %v727, 7
        %v729 = vsub.s32 2, %v728
        %v730 = vrot.slane %v717, %v729
        %734 = vmatprep.subr.mxu0 %v622
        %735 = vmatpush1.msra.mxu0 %v621
        %736 = vmatprep.subr.mxu0 %v625
        %737 = vmatpush1.msra.mxu0 %v624
        %738 = vmatprep.subr.mxu0 %v628
        %739 = vmatpush1.msra.mxu0 %v627
        %740 = vmatprep.subr.mxu0 %v631
        %741 = vmatpush1.msra.mxu0 %v630
        %742 = vmatprep.subr.mxu0 %v634
        %743 = vmatpush1.msra.mxu0 %v633
        %744 = vmatprep.subr.mxu0 %v637
        %745 = vmatpush1.msra.mxu0 %v636
        %746 = vmatprep.subr.mxu0 %v640
        %747 = vmatpush1.msra.mxu0 %v639
        %748 = vmatprep.subr.mxu0 %v643
        %749 = vmatpush1.msra.mxu0 %v642
        %750 = vmatprep.subr.mxu0 %v646
        %751 = vmatpush1.msra.mxu0 %v645
        %752 = vmatprep.subr.mxu0 %v649
        %753 = vmatpush1.msra.mxu0 %v648
        %754 = vmatprep.subr.mxu0 %v652
        %755 = vmatpush1.msra.mxu0 %v651
        %756 = vmatprep.subr.mxu0 %v655
        %757 = vmatpush1.msra.mxu0 %v654
        %758 = vmatprep.subr.mxu0 %v658
        %759 = vmatpush1.msra.mxu0 %v657
        %760 = vmatprep.subr.mxu0 %v661
        %761 = vmatpush1.msra.mxu0 %v660
        %762 = vmatprep.subr.mxu0 %v664
        %763 = vmatpush1.msra.mxu0 %v663
        %764 = vmatprep.subr.mxu0 %v667
        %765 = vmatpush1.msra.mxu0 %v666
        %766 = vmatprep.subr.mxu0 %v670
        %767 = vmatpush1.msra.mxu0 %v669
        %768 = vmatprep.subr.mxu0 %v673
        %769 = vmatpush1.msra.mxu0 %v672
        %770 = vmatprep.subr.mxu0 %v676
        %771 = vmatpush1.msra.mxu0 %v675
        %772 = vmatprep.subr.mxu0 %v679
        %773 = vmatpush1.msra.mxu0 %v678
        %774 = vmatprep.subr.mxu0 %v682
        %775 = vmatpush1.msra.mxu0 %v681
        %776 = vmatprep.subr.mxu0 %v685
        %777 = vmatpush1.msra.mxu0 %v684
        %778 = vmatprep.subr.mxu0 %v688
        %779 = vmatpush1.msra.mxu0 %v687
        %780 = vmatprep.subr.mxu0 %v691
        %781 = vmatpush1.msra.mxu0 %v690
        %782 = vmatprep.subr.mxu0 %v694
        %783 = vmatpush1.msra.mxu0 %v693
        %784 = vmatprep.subr.mxu0 %v697
        %785 = vmatpush1.msra.mxu0 %v696
        %786 = vmatprep.subr.mxu0 %v700
        %787 = vmatpush1.msra.mxu0 %v699
        %788 = vmatprep.subr.mxu0 %v703
        %789 = vmatpush1.msra.mxu0 %v702
        %790 = vmatprep.subr.mxu0 %v706
        %791 = vmatpush1.msra.mxu0 %v705
        %792 = vmatprep.subr.mxu0 %v709
        %793 = vmatpush1.msra.mxu0 %v708
        %794 = vmatprep.subr.mxu0 %v712
        %795 = vmatpush1.msra.mxu0 %v711
        %796 = vmatprep.subr.mxu0 %v715
        %797 = vmatpush1.msra.mxu0 %v714
        %798 = vmatprep.mubr.f32.mxu0 %v608
        %799 = vmatmul.mubr.f32.gmra.mrb[0].mxu0 %v606
        %v800 = vpop.f32.mrb[0].mxu0
        %v801 = vadd.f32 %v722, %v800
        %v802 = vpop.f32.mrb[0].mxu0
        %v803 = vadd.f32 %v726, %v802
        %804 = vmatprep.mubr.f32.mxu0 %v612
        %805 = vmatmul.mubr.f32.gmra.mrb[0].mxu0 %v610
        %v806 = vpop.f32.mrb[0].mxu0
        %v807 = vadd.f32 %v722, %v806
        %v808 = vpop.f32.mrb[0].mxu0
        %v809 = vadd.f32 %v726, %v808
        %810 = vmatprep.mubr.f32.mxu0 %v616
        %811 = vmatmul.mubr.f32.gmra.mrb[0].mxu0 %v614
        %v812 = vpop.f32.mrb[0].mxu0
        %v813 = vadd.f32 %v722, %v812
        %v814 = vpop.f32.mrb[0].mxu0
        %v815 = vadd.f32 %v726, %v814
        %816 = vmatprep.mubr.f32.mxu0 %v620
        %817 = vmatmul.mubr.f32.gmra.mrb[0].mxu0 %v618
        %v818 = vpop.f32.mrb[0].mxu0
        %v819 = vadd.f32 %v722, %v818
        %v820 = vpop.f32.mrb[0].mxu0
        %v821 = vadd.f32 %v726, %v820
        %822 = vdwg.mxu0
        %823 = vmatprep.subr.mxu0 0.0
        %824 = vmatpush1.msra.mxu0 %v623
        %825 = vmatprep.subr.mxu0 0.0
        %826 = vmatpush1.msra.mxu0 %v626
        %827 = vmatprep.subr.mxu0 0.0
        %828 = vmatpush1.msra.mxu0 %v629
        %829 = vmatprep.subr.mxu0 0.0
        %830 = vmatpush1.msra.mxu0 %v632
        %831 = vmatprep.subr.mxu0 0.0
        %832 = vmatpush1.msra.mxu0 %v635
        %833 = vmatprep.subr.mxu0 0.0
        %834 = vmatpush1.msra.mxu0 %v638
        %835 = vmatprep.subr.mxu0 0.0
        %836 = vmatpush1.msra.mxu0 %v641
        %837 = vmatprep.subr.mxu0 0.0
        %838 = vmatpush1.msra.mxu0 %v644
        %839 = vmatprep.subr.mxu0 0.0
        %840 = vmatpush1.msra.mxu0 %v647
        %841 = vmatprep.subr.mxu0 0.0
        %842 = vmatpush1.msra.mxu0 %v650
        %843 = vmatprep.subr.mxu0 0.0
        %844 = vmatpush1.msra.mxu0 %v653
        %845 = vmatprep.subr.mxu0 0.0
        %846 = vmatpush1.msra.mxu0 %v656
        %847 = vmatprep.subr.mxu0 0.0
        %848 = vmatpush1.msra.mxu0 %v659
        %849 = vmatprep.subr.mxu0 0.0
        %850 = vmatpush1.msra.mxu0 %v662
        %851 = vmatprep.subr.mxu0 0.0
        %852 = vmatpush1.msra.mxu0 %v665
        %853 = vmatprep.subr.mxu0 0.0
        %854 = vmatpush1.msra.mxu0 %v668
        %855 = vmatprep.subr.mxu0 0.0
        %856 = vmatpush1.msra.mxu0 %v671
        %857 = vmatprep.subr.mxu0 0.0
        %858 = vmatpush1.msra.mxu0 %v674
        %859 = vmatprep.subr.mxu0 0.0
        %860 = vmatpush1.msra.mxu0 %v677
        %861 = vmatprep.subr.mxu0 0.0
        %862 = vmatpush1.msra.mxu0 %v680
        %863 = vmatprep.subr.mxu0 0.0
        %864 = vmatpush1.msra.mxu0 %v683
        %865 = vmatprep.subr.mxu0 0.0
        %866 = vmatpush1.msra.mxu0 %v686
        %867 = vmatprep.subr.mxu0 0.0
        %868 = vmatpush1.msra.mxu0 %v689
        %869 = vmatprep.subr.mxu0 0.0
        %870 = vmatpush1.msra.mxu0 %v692
        %871 = vmatprep.subr.mxu0 0.0
        %872 = vmatpush1.msra.mxu0 %v695
        %873 = vmatprep.subr.mxu0 0.0
        %874 = vmatpush1.msra.mxu0 %v698
        %875 = vmatprep.subr.mxu0 0.0
        %876 = vmatpush1.msra.mxu0 %v701
        %877 = vmatprep.subr.mxu0 0.0
        %878 = vmatpush1.msra.mxu0 %v704
        %879 = vmatprep.subr.mxu0 0.0
        %880 = vmatpush1.msra.mxu0 %v707
        %881 = vmatprep.subr.mxu0 0.0
        %882 = vmatpush1.msra.mxu0 %v710
        %883 = vmatprep.subr.mxu0 0.0
        %884 = vmatpush1.msra.mxu0 %v713
        %885 = vmatprep.subr.mxu0 0.0
        %886 = vmatpush1.msra.mxu0 %v716
        %887 = vmatprep.mubr.f32.mxu0 %v608
        %888 = vmatmul.mubr.f32.gmra.mrb[0].mxu0 %v606
        %v889 = vpop.f32.mrb[0].mxu0
        %v890 = vadd.f32 %v730, %v889
        %v891 = vpop.f32.mrb[0].mxu0
        %892 = vmatprep.mubr.f32.mxu0 %v612
        %893 = vmatmul.mubr.f32.gmra.mrb[0].mxu0 %v610
        %v894 = vpop.f32.mrb[0].mxu0
        %v895 = vadd.f32 %v730, %v894
        %v896 = vpop.f32.mrb[0].mxu0
        %897 = vmatprep.mubr.f32.mxu0 %v616
        %898 = vmatmul.mubr.f32.gmra.mrb[0].mxu0 %v614
        %v899 = vpop.f32.mrb[0].mxu0
        %v900 = vadd.f32 %v730, %v899
        %v901 = vpop.f32.mrb[0].mxu0
        %902 = vmatprep.mubr.f32.mxu0 %v620
        %903 = vmatmul.mubr.f32.gmra.mrb[0].mxu0 %v618
        %v904 = vpop.f32.mrb[0].mxu0
        %v905 = vadd.f32 %v730, %v904
        %v906 = vpop.f32.mrb[0].mxu0
        %907 = vdwg.mxu0
        %908 = vst [vmem:[%s272] sm:$0xff] %v801
        %909 = vst [vmem:[%s272 + $0x8] sm:$0xff] %v803
        %910 = vst [vmem:[%s272 + $0x10] sm:$0xff] %v890
        %911 = vst [vmem:[%s272 + $0x18] sm:$0xff] %v807
        %912 = vst [vmem:[%s272 + $0x20] sm:$0xff] %v809
        %913 = vst [vmem:[%s272 + $0x28] sm:$0xff] %v895
        %914 = vst [vmem:[%s272 + $0x30] sm:$0xff] %v813
        %915 = vst [vmem:[%s272 + $0x38] sm:$0xff] %v815
        %916 = vst [vmem:[%s272 + $0x40] sm:$0xff] %v900
        %917 = vst [vmem:[%s272 + $0x48] sm:$0xff] %v819
        %918 = vst [vmem:[%s272 + $0x50] sm:$0xff] %v821
        %919 = vst [vmem:[%s272 + $0x58] sm:$0xff] %v905
        %s920 = sand.u32 %s141, 1
        %s921 = scalar_lea.sflag [#allocation4], %s920
        %s922 = sand.u32 %s141, 1
        %s923 = smul.addr %s922, 96
        %s924 = scalar_lea.vmem [#allocation8], %s923
        // Predicated region
        $region53: #{tpu_custom_call.1} parent=39 // pred_check
          %p925 = pneg %p151
        $region54: #{tpu_custom_call.1} parent=39 // pred_check_branch
          %927 = sbr.rel (%p925) target = $region56
        $region55: #{tpu_custom_call.1} parent=39 // pred_region
          %s928 = smul.u32 4, %s23
          %s930 = ssub.s32 1536, 1536
          %931 = vsyncadd %s921, %s930
          %s932 = smul.addr %s928, 3
          %s933 = smul.addr %s932, 128
          %s934 = scalar_lea.hbm %s5, %s933
          %s935 = sshll.u32 %s924, 4
          %s936 = int_to_ptr.vmem [resolvable:$true] %s935
          %941 = dma.vmem_to_hbm [thread:$0]  %s936, 1536, %s934, %s921, 384, 384, 24
        $region56: #{tpu_custom_call.1} parent=39 // pred_fallthru
          _
      $region40: #{tpu_custom_call.1} parent=5 // pred_fallthru
        _
      %p942 = scmp.le.s32.totalorder 2, %s18
      // Predicated region
      $region57: #{tpu_custom_call.1} parent=5 // pred_check
        %p943 = pneg %p942
      $region58: #{tpu_custom_call.1} parent=5 // pred_check_branch
        %945 = sbr.rel (%p943) target = $region60
      $region59: #{tpu_custom_call.1} parent=5 // pred_region
        %s946 = ssub.s32 %s18, 2
        // Predicated region
        $region61: #{tpu_custom_call.1} parent=59 // pred_check
          %p947 = pneg %p157
        $region62: #{tpu_custom_call.1} parent=59 // pred_check_branch
          %949 = sbr.rel (%p947) target = $region64
        $region63: #{tpu_custom_call.1} parent=59 // pred_region
          %s950 = sand.u32 %s142, 1
          %s951 = scalar_lea.sflag [#allocation4], %s950
          %s952 = sand.u32 %s142, 1
          %s953 = smul.addr %s952, 96
          %s954 = scalar_lea.vmem [#allocation8], %s953
          %955 = dma.done %s951, 1536
        $region64: #{tpu_custom_call.1} parent=59 // pred_fallthru
          _
      $region60: #{tpu_custom_call.1} parent=5 // pred_fallthru
        _
    $region6: #{tpu_custom_call.1} parent=1 // loop_footer
      %s22 = sadd.s32 1, %s18
    $region7: #{tpu_custom_call.1} parent=1 // loop_footer_branch
      %17 = sbr.rel target = $region3
    $region8: #{tpu_custom_call.1} parent=1 // loop_exit
      _
    %956 = vsyncpa [#allocation3], 1
    %s957 = scalar_lea.sflag [#allocation3], 1
    %958 = vsyncpa %s957, 1
    %959 = vsyncpa [#allocation6], 1
    %960 = vsyncpa [#allocation4], 1
    %s961 = scalar_lea.sflag [#allocation4], 1
    %962 = vsyncpa %s961, 1

// kernel: tpu_custom_call.1
$region0: #{tpu_custom_call.1}
  #allocation0 [shape = 'u32[]', space=smem, size = 0x4, offset = 0x4, fixed_abs, tag = 'smem constant byte address 0x4 - core index']
  #allocation1 [shape = 'u32[144,128]{1,0:T(1,128)}', space=vmem, size = 0x12000, scoped, tag = 'internal scratch']
  %s0 = inlined_call_operand.hbm [shape: f32[64,384], index: 0, kind: input, shape index: {}]
  %s1 = inlined_call_operand.hbm [shape: f32[384,256], index: 1, kind: input, shape index: {}]
  %s2 = inlined_call_operand.vmem [shape: f32[1,256], index: 2, kind: input, shape index: {}]
  %s3 = inlined_call_operand.hbm [shape: f32[256,384], index: 3, kind: input, shape index: {}]
  %s4 = inlined_call_operand.vmem [shape: f32[1,384], index: 4, kind: input, shape index: {}]
  %s5 = inlined_call_operand.hbm [shape: f32[64,384], index: 5, kind: output, shape index: {}]
  %s6 = sld [smem:[#allocation0]]
  $region65: #{tpu_custom_call.1} parent=0
    _
  %s8 = ssub.s32 1, %s6
  %s9 = scalar_select 0, %s8, %s6
  $region1: #{tpu_custom_call.1} parent=0
    #allocation2 [shape = 'u8[98304]{0}', space=vmem, size = 0x18000, scoped, tag = 'input window, operand 0']
    #allocation3 [shape = 's32[2]{0}', space=sflag, size = 0x8, scoped, tag = 'scoped memory for tpu_custom_call.1']
    #allocation4 [shape = 's32[2]{0}', space=sflag, size = 0x8, scoped, tag = 'scoped memory for tpu_custom_call.1']
    #allocation5 [shape = 'u8[393216]{0}', space=vmem, size = 0x60000, scoped, tag = 'input window, operand 1, single buffered']
    #allocation6 [shape = 's32[1]{0}', space=sflag, size = 0x4, scoped, tag = 'scoped memory for tpu_custom_call.1']
    #allocation7 [shape = 'u8[393216]{0}', space=vmem, size = 0x60000, scoped, tag = 'input window, operand 3, single buffered']
    #allocation8 [shape = 'u8[98304]{0}', space=vmem, size = 0x18000, scoped, tag = 'output window, operand 0']
    %10 = vsyncpa [#allocation3], 0
    %s11 = scalar_lea.sflag [#allocation3], 1
    %12 = vsyncpa %s11, 0
    %13 = vsyncpa [#allocation6], 0
    %14 = vsyncpa [#allocation4], 0
    %s15 = scalar_lea.sflag [#allocation4], 1
    %16 = vsyncpa %s15, 0
    loop: start=0, step=1, limit=4
    $region2: #{tpu_custom_call.1} parent=1 // loop_pre_header
      _
    $region3: #{tpu_custom_call.1} parent=1 // loop_header
      %s18 = sphi 0, %s22
      %p19 = scmp.ge.s32.totalorder %s18, 4
      %s28 = sphi 0, %s30
      %s31 = sphi 0, %s28
      %s32 = sphi 0, %s31
      %s48 = sphi 0, %s32
      %s52 = sphi 0, %s52
      %s54 = sphi 0, %s52
      %s55 = sphi 0, %s54
      %s69 = sphi 0, %s55
      %s73 = sphi 0, %s73
      %s75 = sphi 0, %s73
      %s76 = sphi 0, %s75
      %s90 = sphi 0, %s76
      %s94 = sphi 0, %s94
      %s96 = sphi 0, %s94
      %s97 = sphi 0, %s96
      %s111 = sphi 0, %s97
      %s115 = sphi 0, %s115
      %s117 = sphi 0, %s115
      %s118 = sphi 0, %s117
      %s132 = sphi 0, %s118
      %s138 = sphi 0, %s140
      %s141 = sphi 0, %s138
      %s142 = sphi 0, %s141
      %s158 = sphi 0, %s142
    $region4: #{tpu_custom_call.1} parent=1 // loop_header_branch
      %21 = sbr.rel (%p19) target = $region8
    $region5: #{tpu_custom_call.1} parent=1 // loop_body
      %s23 = ssub.s32 %s18, 1
      %s24 = ssub.s32 %s18, 2
      %s25 = sadd.s32 %s18, 1
      %s26 = ssub.s32 %s18, %s25
      %p27 = scmp.eq.s32.totalorder %s26, 0
      %s29 = sadd.s32 %s28, 1
      %s30 = scalar_select %p27, %s28, %s29
      %p33 = pneg %p27
      %p34 = scmp.eq.s32.totalorder %s18, 1
      %p35 = por %p33, %p34
      %p36 = scmp.ne.s32.totalorder %s28, %s31
      %p37 = scmp.eq.s32.totalorder %s18, 0
      %p38 = por %p36, %p37
      %p39 = scmp.ne.s32.totalorder %s28, %s31
      %p40 = scmp.eq.s32.totalorder %s23, 1
      %p41 = por %p39, %p40
      %p42 = scmp.ne.s32.totalorder %s31, %s32
      %p43 = scmp.eq.s32.totalorder %s23, 0
      %p44 = por %p42, %p43
      %p45 = scmp.ne.s32.totalorder %s31, %s32
      %p46 = scmp.eq.s32.totalorder %s24, 1
      %p47 = por %p45, %p46
      %p49 = scmp.ne.s32.totalorder %s32, %s48
      %p50 = scmp.eq.s32.totalorder %s24, 0
      %p51 = por %p49, %p50
      %s53 = sadd.s32 %s52, 1
      %p56 = scmp.eq.s32.totalorder %s18, 1
      %p57 = scmp.ne.s32.totalorder %s52, %s54
      %p58 = scmp.eq.s32.totalorder %s18, 0
      %p59 = por %p57, %p58
      %p60 = scmp.ne.s32.totalorder %s52, %s54
      %p61 = scmp.eq.s32.totalorder %s23, 1
      %p62 = por %p60, %p61
      %p63 = scmp.ne.s32.totalorder %s54, %s55
      %p64 = scmp.eq.s32.totalorder %s23, 0
      %p65 = por %p63, %p64
      %p66 = scmp.ne.s32.totalorder %s54, %s55
      %p67 = scmp.eq.s32.totalorder %s24, 1
      %p68 = por %p66, %p67
      %p70 = scmp.ne.s32.totalorder %s55, %s69
      %p71 = scmp.eq.s32.totalorder %s24, 0
      %p72 = por %p70, %p71
      %s74 = sadd.s32 %s73, 1
      %p77 = scmp.eq.s32.totalorder %s18, 1
      %p78 = scmp.ne.s32.totalorder %s73, %s75
      %p79 = scmp.eq.s32.totalorder %s18, 0
      %p80 = por %p78, %p79
      %p81 = scmp.ne.s32.totalorder %s73, %s75
      %p82 = scmp.eq.s32.totalorder %s23, 1
      %p83 = por %p81, %p82
      %p84 = scmp.ne.s32.totalorder %s75, %s76
      %p85 = scmp.eq.s32.totalorder %s23, 0
      %p86 = por %p84, %p85
      %p87 = scmp.ne.s32.totalorder %s75, %s76
      %p88 = scmp.eq.s32.totalorder %s24, 1
      %p89 = por %p87, %p88
      %p91 = scmp.ne.s32.totalorder %s76, %s90
      %p92 = scmp.eq.s32.totalorder %s24, 0
      %p93 = por %p91, %p92
      %s95 = sadd.s32 %s94, 1
      %p98 = scmp.eq.s32.totalorder %s18, 1
      %p99 = scmp.ne.s32.totalorder %s94, %s96
      %p100 = scmp.eq.s32.totalorder %s18, 0
      %p101 = por %p99, %p100
      %p102 = scmp.ne.s32.totalorder %s94, %s96
      %p103 = scmp.eq.s32.totalorder %s23, 1
      %p104 = por %p102, %p103
      %p105 = scmp.ne.s32.totalorder %s96, %s97
      %p106 = scmp.eq.s32.totalorder %s23, 0
      %p107 = por %p105, %p106
      %p108 = scmp.ne.s32.totalorder %s96, %s97
      %p109 = scmp.eq.s32.totalorder %s24, 1
      %p110 = por %p108, %p109
      %p112 = scmp.ne.s32.totalorder %s97, %s111
      %p113 = scmp.eq.s32.totalorder %s24, 0
      %p114 = por %p112, %p113
      %s116 = sadd.s32 %s115, 1
      %p119 = scmp.eq.s32.totalorder %s18, 1
      %p120 = scmp.ne.s32.totalorder %s115, %s117
      %p121 = scmp.eq.s32.totalorder %s18, 0
      %p122 = por %p120, %p121
      %p123 = scmp.ne.s32.totalorder %s115, %s117
      %p124 = scmp.eq.s32.totalorder %s23, 1
      %p125 = por %p123, %p124
      %p126 = scmp.ne.s32.totalorder %s117, %s118
      %p127 = scmp.eq.s32.totalorder %s23, 0
      %p128 = por %p126, %p127
      %p129 = scmp.ne.s32.totalorder %s117, %s118
      %p130 = scmp.eq.s32.totalorder %s24, 1
      %p131 = por %p129, %p130
      %p133 = scmp.ne.s32.totalorder %s118, %s132
      %p134 = scmp.eq.s32.totalorder %s24, 0
      %p135 = por %p133, %p134
      %s136 = ssub.s32 %s18, %s25
      %p137 = scmp.eq.s32.totalorder %s136, 0
      %s139 = sadd.s32 %s138, 1
      %s140 = scalar_select %p137, %s138, %s139
      %p143 = pneg %p137
      %p144 = scmp.eq.s32.totalorder %s18, 1
      %p145 = por %p143, %p144
      %p146 = scmp.ne.s32.totalorder %s138, %s141
      %p147 = scmp.eq.s32.totalorder %s18, 0
      %p148 = por %p146, %p147
      %p149 = scmp.ne.s32.totalorder %s138, %s141
      %p150 = scmp.eq.s32.totalorder %s23, 1
      %p151 = por %p149, %p150
      %p152 = scmp.ne.s32.totalorder %s141, %s142
      %p153 = scmp.eq.s32.totalorder %s23, 0
      %p154 = por %p152, %p153
      %p155 = scmp.ne.s32.totalorder %s141, %s142
      %p156 = scmp.eq.s32.totalorder %s24, 1
      %p157 = por %p155, %p156
      %p159 = scmp.ne.s32.totalorder %s142, %s158
      %p160 = scmp.eq.s32.totalorder %s24, 0
      %p161 = por %p159, %p160
      %p162 = scmp.le.s32.totalorder 1, %s18
      %p163 = scmp.lt.s32.totalorder %s18, 3
      %p164 = pnand %p162, %p163
      %p165 = pneg %p164
      // Predicated region
      $region9: #{tpu_custom_call.1} parent=5 // pred_check
        _
      $region10: #{tpu_custom_call.1} parent=5 // pred_check_branch
        %167 = sbr.rel (%p164) target = $region12
      $region11: #{tpu_custom_call.1} parent=5 // pred_region
        %s168 = ssub.s32 %s18, 1
        // Predicated region
        $region13: #{tpu_custom_call.1} parent=11 // pred_check
          %p169 = pneg %p65
        $region14: #{tpu_custom_call.1} parent=11 // pred_check_branch
          %171 = sbr.rel (%p169) target = $region16
        $region15: #{tpu_custom_call.1} parent=11 // pred_region
          %s173 = ssub.s32 12288, 12288
          %174 = vsyncadd [#allocation6], %s173
          %s175 = sshll.u32 [#allocation5], 4
          %s176 = int_to_ptr.vmem [resolvable:$true] %s175
          %181 = dma.hbm_to_vmem [thread:$0]  %s1, 12288, %s176, [#allocation6], 256, 256, 16
        $region16: #{tpu_custom_call.1} parent=11 // pred_fallthru
          _
        // Predicated region
        $region17: #{tpu_custom_call.1} parent=11 // pred_check
          %p182 = pneg %p86
        $region18: #{tpu_custom_call.1} parent=11 // pred_check_branch
          %184 = sbr.rel (%p182) target = $region20
        $region19: #{tpu_custom_call.1} parent=11 // pred_region
          _
        $region20: #{tpu_custom_call.1} parent=11 // pred_fallthru
          _
        // Predicated region
        $region21: #{tpu_custom_call.1} parent=11 // pred_check
          %p185 = pneg %p107
        $region22: #{tpu_custom_call.1} parent=11 // pred_check_branch
          %187 = sbr.rel (%p185) target = $region24
        $region23: #{tpu_custom_call.1} parent=11 // pred_region
          %s189 = ssub.s32 12288, 12288
          %190 = vsyncadd [#allocation6], %s189
          %s191 = sshll.u32 [#allocation7], 4
          %s192 = int_to_ptr.vmem [resolvable:$true] %s191
          %197 = dma.hbm_to_vmem [thread:$0]  %s3, 12288, %s192, [#allocation6], 384, 384, 24
        $region24: #{tpu_custom_call.1} parent=11 // pred_fallthru
          _
        // Predicated region
        $region25: #{tpu_custom_call.1} parent=11 // pred_check
          %p198 = pneg %p128
        $region26: #{tpu_custom_call.1} parent=11 // pred_check_branch
          %200 = sbr.rel (%p198) target = $region28
        $region27: #{tpu_custom_call.1} parent=11 // pred_region
          _
        $region28: #{tpu_custom_call.1} parent=11 // pred_fallthru
          _
      $region12: #{tpu_custom_call.1} parent=5 // pred_fallthru
        _
      %p201 = scmp.lt.s32.totalorder %s18, 2
      // Predicated region
      $region29: #{tpu_custom_call.1} parent=5 // pred_check
        %p202 = pneg %p201
      $region30: #{tpu_custom_call.1} parent=5 // pred_check_branch
        %204 = sbr.rel (%p202) target = $region32
      $region31: #{tpu_custom_call.1} parent=5 // pred_region
        // Predicated region
        $region33: #{tpu_custom_call.1} parent=31 // pred_check
          %p205 = pneg %p38
        $region34: #{tpu_custom_call.1} parent=31 // pred_check_branch
          %207 = sbr.rel (%p205) target = $region36
        $region35: #{tpu_custom_call.1} parent=31 // pred_region
          %s208 = sand.u32 %s28, 1
          %s209 = scalar_lea.sflag [#allocation3], %s208
          %s210 = sand.u32 %s28, 1
          %s211 = smul.addr %s210, 96
          %s212 = scalar_lea.vmem [#allocation2], %s211
          %s213 = smul.u32 4, %s18
          %s215 = ssub.s32 1536, 1536
          %216 = vsyncadd %s209, %s215
          %s217 = smul.addr %s213, 3
          %s218 = smul.addr %s217, 128
          %s219 = scalar_lea.hbm %s0, %s218
          %s220 = sshll.u32 %s212, 4
          %s221 = int_to_ptr.vmem [resolvable:$true] %s220
          %226 = dma.hbm_to_vmem [thread:$0]  %s219, 1536, %s221, %s209, 384, 384, 24
        $region36: #{tpu_custom_call.1} parent=31 // pred_fallthru
          _
      $region32: #{tpu_custom_call.1} parent=5 // pred_fallthru
        _
      %p227 = scmp.le.s32.totalorder 1, %s18
      %p228 = scmp.lt.s32.totalorder %s18, 3
      %p229 = pnand %p227, %p228
      %p230 = pneg %p229
      // Predicated region
      $region37: #{tpu_custom_call.1} parent=5 // pred_check
        _
      $region38: #{tpu_custom_call.1} parent=5 // pred_check_branch
        %232 = sbr.rel (%p229) target = $region40
      $region39: #{tpu_custom_call.1} parent=5 // pred_region
        %s233 = ssub.s32 %s18, 1
        %s234 = sand.u32 %s31, 1
        %s235 = scalar_lea.sflag [#allocation3], %s234
        %s236 = sand.u32 %s31, 1
        %s237 = smul.addr %s236, 96
        %s238 = scalar_lea.vmem [#allocation2], %s237
        // Predicated region
        $region41: #{tpu_custom_call.1} parent=39 // pred_check
          %p239 = pneg %p44
        $region42: #{tpu_custom_call.1} parent=39 // pred_check_branch
          %241 = sbr.rel (%p239) target = $region44
        $region43: #{tpu_custom_call.1} parent=39 // pred_region
          %242 = dma.done %s235, 1536
        $region44: #{tpu_custom_call.1} parent=39 // pred_fallthru
          _
        // Predicated region
        $region45: #{tpu_custom_call.1} parent=39 // pred_check
          %p243 = pneg %p65
        $region46: #{tpu_custom_call.1} parent=39 // pred_check_branch
          %245 = sbr.rel (%p243) target = $region48
        $region47: #{tpu_custom_call.1} parent=39 // pred_region
          %246 = dma.done [#allocation6], 12288
        $region48: #{tpu_custom_call.1} parent=39 // pred_fallthru
          _
        // Predicated region
        $region49: #{tpu_custom_call.1} parent=39 // pred_check
          %p247 = pneg %p107
        $region50: #{tpu_custom_call.1} parent=39 // pred_check_branch
          %249 = sbr.rel (%p247) target = $region52
        $region51: #{tpu_custom_call.1} parent=39 // pred_region
          %250 = dma.done [#allocation6], 12288
        $region52: #{tpu_custom_call.1} parent=39 // pred_fallthru
          _
        %s251 = sand.u32 %s31, 1
        %s252 = scalar_lea.sflag [#allocation3], %s251
        %s253 = sand.u32 %s31, 1
        %s254 = smul.addr %s253, 96
        %s255 = scalar_lea.vmem [#allocation2], %s254
        %p256 = pneg %p44
        %p257 = pneg %p41
        %p258 = pneg %p65
        %p259 = pneg %p62
        %p260 = pneg %p86
        %p261 = pneg %p83
        %p262 = pneg %p107
        %p263 = pneg %p104
        %p264 = pneg %p128
        %p265 = pneg %p125
        %p266 = pneg %p154
        %p267 = pneg %p151
        %s268 = sand.u32 %s141, 1
        %s269 = scalar_lea.sflag [#allocation4], %s268
        %s270 = sand.u32 %s141, 1
        %s271 = smul.addr %s270, 96
        %s272 = scalar_lea.vmem [#allocation8], %s271
        %s273 = smul.u32 4, %s23
        %s274 = smul.u32 4, %s23
        %v275 = vld [vmem:[%s238] sm:$0xff]
        %v276 = vld [vmem:[%s238 + $0x8] sm:$0xff]
        %v277 = vld [vmem:[%s238 + $0x10] sm:$0xff]
        %v278 = vld [vmem:[%s238 + $0x18] sm:$0xff]
        %v279 = vld [vmem:[%s238 + $0x20] sm:$0xff]
        %v280 = vld [vmem:[%s238 + $0x28] sm:$0xff]
        %v281 = vld [vmem:[%s238 + $0x30] sm:$0xff]
        %v282 = vld [vmem:[%s238 + $0x38] sm:$0xff]
        %v283 = vld [vmem:[%s238 + $0x40] sm:$0xff]
        %v284 = vld [vmem:[%s238 + $0x48] sm:$0xff]
        %v285 = vld [vmem:[%s238 + $0x50] sm:$0xff]
        %v286 = vld [vmem:[%s238 + $0x58] sm:$0xff]
        %v287 = vld [vmem:[#allocation5] sm:$0xff]
        %v288 = vld [vmem:[#allocation5 + $0x8] sm:$0xff]
        %v289 = vld [vmem:[#allocation5 + $0x10] sm:$0xff]
        %v290 = vld [vmem:[#allocation5 + $0x18] sm:$0xff]
        %v291 = vld [vmem:[#allocation5 + $0x20] sm:$0xff]
        %v292 = vld [vmem:[#allocation5 + $0x28] sm:$0xff]
        %v293 = vld [vmem:[#allocation5 + $0x30] sm:$0xff]
        %v294 = vld [vmem:[#allocation5 + $0x38] sm:$0xff]
        %v295 = vld [vmem:[#allocation5 + $0x40] sm:$0xff]
        %v296 = vld [vmem:[#allocation5 + $0x48] sm:$0xff]
        %v297 = vld [vmem:[#allocation5 + $0x50] sm:$0xff]
        %v298 = vld [vmem:[#allocation5 + $0x58] sm:$0xff]
        %v299 = vld [vmem:[#allocation5 + $0x60] sm:$0xff]
        %v300 = vld [vmem:[#allocation5 + $0x68] sm:$0xff]
        %v301 = vld [vmem:[#allocation5 + $0x70] sm:$0xff]
        %v302 = vld [vmem:[#allocation5 + $0x78] sm:$0xff]
        %v303 = vld [vmem:[#allocation5 + $0x80] sm:$0xff]
        %v304 = vld [vmem:[#allocation5 + $0x88] sm:$0xff]
        %v305 = vld [vmem:[#allocation5 + $0x90] sm:$0xff]
        %v306 = vld [vmem:[#allocation5 + $0x98] sm:$0xff]
        %v307 = vld [vmem:[#allocation5 + $0xa0] sm:$0xff]
        %v308 = vld [vmem:[#allocation5 + $0xa8] sm:$0xff]
        %v309 = vld [vmem:[#allocation5 + $0xb0] sm:$0xff]
        %v310 = vld [vmem:[#allocation5 + $0xb8] sm:$0xff]
        %v311 = vld [vmem:[#allocation5 + $0xc0] sm:$0xff]
        %v312 = vld [vmem:[#allocation5 + $0xc8] sm:$0xff]
        %v313 = vld [vmem:[#allocation5 + $0xd0] sm:$0xff]
        %v314 = vld [vmem:[#allocation5 + $0xd8] sm:$0xff]
        %v315 = vld [vmem:[#allocation5 + $0xe0] sm:$0xff]
        %v316 = vld [vmem:[#allocation5 + $0xe8] sm:$0xff]
        %v317 = vld [vmem:[#allocation5 + $0xf0] sm:$0xff]
        %v318 = vld [vmem:[#allocation5 + $0xf8] sm:$0xff]
        %v319 = vld [vmem:[#allocation5 + $0x100] sm:$0xff]
        %v320 = vld [vmem:[#allocation5 + $0x108] sm:$0xff]
        %v321 = vld [vmem:[#allocation5 + $0x110] sm:$0xff]
        %v322 = vld [vmem:[#allocation5 + $0x118] sm:$0xff]
        %v323 = vld [vmem:[#allocation5 + $0x120] sm:$0xff]
        %v324 = vld [vmem:[#allocation5 + $0x128] sm:$0xff]
        %v325 = vld [vmem:[#allocation5 + $0x130] sm:$0xff]
        %v326 = vld [vmem:[#allocation5 + $0x138] sm:$0xff]
        %v327 = vld [vmem:[#allocation5 + $0x140] sm:$0xff]
        %v328 = vld [vmem:[#allocation5 + $0x148] sm:$0xff]
        %v329 = vld [vmem:[#allocation5 + $0x150] sm:$0xff]
        %v330 = vld [vmem:[#allocation5 + $0x158] sm:$0xff]
        %v331 = vld [vmem:[#allocation5 + $0x160] sm:$0xff]
        %v332 = vld [vmem:[#allocation5 + $0x168] sm:$0xff]
        %v333 = vld [vmem:[#allocation5 + $0x170] sm:$0xff]
        %v334 = vld [vmem:[#allocation5 + $0x178] sm:$0xff]
        %v335 = vld [vmem:[#allocation5 + $0x180] sm:$0xff]
        %v336 = vld [vmem:[#allocation5 + $0x188] sm:$0xff]
        %v337 = vld [vmem:[#allocation5 + $0x190] sm:$0xff]
        %v338 = vld [vmem:[#allocation5 + $0x198] sm:$0xff]
        %v339 = vld [vmem:[#allocation5 + $0x1a0] sm:$0xff]
        %v340 = vld [vmem:[#allocation5 + $0x1a8] sm:$0xff]
        %v341 = vld [vmem:[#allocation5 + $0x1b0] sm:$0xff]
        %v342 = vld [vmem:[#allocation5 + $0x1b8] sm:$0xff]
        %v343 = vld [vmem:[#allocation5 + $0x1c0] sm:$0xff]
        %v344 = vld [vmem:[#allocation5 + $0x1c8] sm:$0xff]
        %v345 = vld [vmem:[#allocation5 + $0x1d0] sm:$0xff]
        %v346 = vld [vmem:[#allocation5 + $0x1d8] sm:$0xff]
        %v347 = vld [vmem:[#allocation5 + $0x1e0] sm:$0xff]
        %v348 = vld [vmem:[#allocation5 + $0x1e8] sm:$0xff]
        %v349 = vld [vmem:[#allocation5 + $0x1f0] sm:$0xff]
        %v350 = vld [vmem:[#allocation5 + $0x1f8] sm:$0xff]
        %v351 = vld [vmem:[#allocation5 + $0x200] sm:$0xff]
        %v352 = vld [vmem:[#allocation5 + $0x208] sm:$0xff]
        %v353 = vld [vmem:[#allocation5 + $0x210] sm:$0xff]
        %v354 = vld [vmem:[#allocation5 + $0x218] sm:$0xff]
        %v355 = vld [vmem:[#allocation5 + $0x220] sm:$0xff]
        %v356 = vld [vmem:[#allocation5 + $0x228] sm:$0xff]
        %v357 = vld [vmem:[#allocation5 + $0x230] sm:$0xff]
        %v358 = vld [vmem:[#allocation5 + $0x238] sm:$0xff]
        %v359 = vld [vmem:[#allocation5 + $0x240] sm:$0xff]
        %v360 = vld [vmem:[#allocation5 + $0x248] sm:$0xff]
        %v361 = vld [vmem:[#allocation5 + $0x250] sm:$0xff]
        %v362 = vld [vmem:[#allocation5 + $0x258] sm:$0xff]
        %v363 = vld [vmem:[#allocation5 + $0x260] sm:$0xff]
        %v364 = vld [vmem:[#allocation5 + $0x268] sm:$0xff]
        %v365 = vld [vmem:[#allocation5 + $0x270] sm:$0xff]
        %v366 = vld [vmem:[#allocation5 + $0x278] sm:$0xff]
        %v367 = vld [vmem:[#allocation5 + $0x280] sm:$0xff]
        %v368 = vld [vmem:[#allocation5 + $0x288] sm:$0xff]
        %v369 = vld [vmem:[#allocation5 + $0x290] sm:$0xff]
        %v370 = vld [vmem:[#allocation5 + $0x298] sm:$0xff]
        %v371 = vld [vmem:[#allocation5 + $0x2a0] sm:$0xff]
        %v372 = vld [vmem:[#allocation5 + $0x2a8] sm:$0xff]
        %v373 = vld [vmem:[#allocation5 + $0x2b0] sm:$0xff]
        %v374 = vld [vmem:[#allocation5 + $0x2b8] sm:$0xff]
        %v375 = vld [vmem:[#allocation5 + $0x2c0] sm:$0xff]
        %v376 = vld [vmem:[#allocation5 + $0x2c8] sm:$0xff]
        %v377 = vld [vmem:[#allocation5 + $0x2d0] sm:$0xff]
        %v378 = vld [vmem:[#allocation5 + $0x2d8] sm:$0xff]
        %v379 = vld [vmem:[#allocation5 + $0x2e0] sm:$0xff]
        %v380 = vld [vmem:[#allocation5 + $0x2e8] sm:$0xff]
        %v381 = vld [vmem:[#allocation5 + $0x2f0] sm:$0xff]
        %v382 = vld [vmem:[#allocation5 + $0x2f8] sm:$0xff]
        %v383 = vld [vmem:[%s2] sm:$0x3]
        %v385 = vlaneseq
        %v386 = vshrl.u32 %v385, 7
        %v387 = vsub.s32 0, %v386
        %v388 = vrot.slane %v383, %v387
        %v389 = vlaneseq
        %v390 = vshrl.u32 %v389, 7
        %v391 = vsub.s32 1, %v390
        %v392 = vrot.slane %v383, %v391
        %395 = vmatprep.subr.mxu0 %v288
        %396 = vmatpush1.msra.mxu0 %v287
        %397 = vmatprep.subr.mxu0 %v290
        %398 = vmatpush1.msra.mxu0 %v289
        %399 = vmatprep.subr.mxu0 %v292
        %400 = vmatpush1.msra.mxu0 %v291
        %401 = vmatprep.subr.mxu0 %v294
        %402 = vmatpush1.msra.mxu0 %v293
        %403 = vmatprep.subr.mxu0 %v296
        %404 = vmatpush1.msra.mxu0 %v295
        %405 = vmatprep.subr.mxu0 %v298
        %406 = vmatpush1.msra.mxu0 %v297
        %407 = vmatprep.subr.mxu0 %v300
        %408 = vmatpush1.msra.mxu0 %v299
        %409 = vmatprep.subr.mxu0 %v302
        %410 = vmatpush1.msra.mxu0 %v301
        %411 = vmatprep.subr.mxu0 %v304
        %412 = vmatpush1.msra.mxu0 %v303
        %413 = vmatprep.subr.mxu0 %v306
        %414 = vmatpush1.msra.mxu0 %v305
        %415 = vmatprep.subr.mxu0 %v308
        %416 = vmatpush1.msra.mxu0 %v307
        %417 = vmatprep.subr.mxu0 %v310
        %418 = vmatpush1.msra.mxu0 %v309
        %419 = vmatprep.subr.mxu0 %v312
        %420 = vmatpush1.msra.mxu0 %v311
        %421 = vmatprep.subr.mxu0 %v314
        %422 = vmatpush1.msra.mxu0 %v313
        %423 = vmatprep.subr.mxu0 %v316
        %424 = vmatpush1.msra.mxu0 %v315
        %425 = vmatprep.subr.mxu0 %v318
        %426 = vmatpush1.msra.mxu0 %v317
        %427 = vmatprep.subr.mxu0 %v320
        %428 = vmatpush1.msra.mxu0 %v319
        %429 = vmatprep.subr.mxu0 %v322
        %430 = vmatpush1.msra.mxu0 %v321
        %431 = vmatprep.subr.mxu0 %v324
        %432 = vmatpush1.msra.mxu0 %v323
        %433 = vmatprep.subr.mxu0 %v326
        %434 = vmatpush1.msra.mxu0 %v325
        %435 = vmatprep.subr.mxu0 %v328
        %436 = vmatpush1.msra.mxu0 %v327
        %437 = vmatprep.subr.mxu0 %v330
        %438 = vmatpush1.msra.mxu0 %v329
        %439 = vmatprep.subr.mxu0 %v332
        %440 = vmatpush1.msra.mxu0 %v331
        %441 = vmatprep.subr.mxu0 %v334
        %442 = vmatpush1.msra.mxu0 %v333
        %443 = vmatprep.subr.mxu0 %v336
        %444 = vmatpush1.msra.mxu0 %v335
        %445 = vmatprep.subr.mxu0 %v338
        %446 = vmatpush1.msra.mxu0 %v337
        %447 = vmatprep.subr.mxu0 %v340
        %448 = vmatpush1.msra.mxu0 %v339
        %449 = vmatprep.subr.mxu0 %v342
        %450 = vmatpush1.msra.mxu0 %v341
        %451 = vmatprep.subr.mxu0 %v344
        %452 = vmatpush1.msra.mxu0 %v343
        %453 = vmatprep.subr.mxu0 %v346
        %454 = vmatpush1.msra.mxu0 %v345
        %455 = vmatprep.subr.mxu0 %v348
        %456 = vmatpush1.msra.mxu0 %v347
        %457 = vmatprep.subr.mxu0 %v350
        %458 = vmatpush1.msra.mxu0 %v349
        %459 = vmatprep.mubr.f32.mxu0 %v276
        %460 = vmatmul.mubr.f32.gmra.mrb[0].mxu0 %v275
        %v461 = vpop.f32.mrb[0].mxu0
        %v462 = vadd.f32 %v388, %v461
        %v463 = vpop.f32.mrb[0].mxu0
        %v464 = vadd.f32 %v392, %v463
        %465 = vmatprep.mubr.f32.mxu0 %v279
        %466 = vmatmul.mubr.f32.gmra.mrb[0].mxu0 %v278
        %v467 = vpop.f32.mrb[0].mxu0
        %v468 = vadd.f32 %v388, %v467
        %v469 = vpop.f32.mrb[0].mxu0
        %v470 = vadd.f32 %v392, %v469
        %471 = vmatprep.mubr.f32.mxu0 %v282
        %472 = vmatmul.mubr.f32.gmra.mrb[0].mxu0 %v281
        %v473 = vpop.f32.mrb[0].mxu0
        %v474 = vadd.f32 %v388, %v473
        %v475 = vpop.f32.mrb[0].mxu0
        %v476 = vadd.f32 %v392, %v475
        %477 = vmatprep.mubr.f32.mxu0 %v285
        %478 = vmatmul.mubr.f32.gmra.mrb[0].mxu0 %v284
        %v479 = vpop.f32.mrb[0].mxu0
        %v480 = vadd.f32 %v388, %v479
        %v481 = vpop.f32.mrb[0].mxu0
        %v482 = vadd.f32 %v392, %v481
        %483 = vdwg.mxu0
        %484 = vmatprep.subr.mxu0 %v352
        %485 = vmatpush1.msra.mxu0 %v351
        %486 = vmatprep.subr.mxu0 %v354
        %487 = vmatpush1.msra.mxu0 %v353
        %488 = vmatprep.subr.mxu0 %v356
        %489 = vmatpush1.msra.mxu0 %v355
        %490 = vmatprep.subr.mxu0 %v358
        %491 = vmatpush1.msra.mxu0 %v357
        %492 = vmatprep.subr.mxu0 %v360
        %493 = vmatpush1.msra.mxu0 %v359
        %494 = vmatprep.subr.mxu0 %v362
        %495 = vmatpush1.msra.mxu0 %v361
        %496 = vmatprep.subr.mxu0 %v364
        %497 = vmatpush1.msra.mxu0 %v363
        %498 = vmatprep.subr.mxu0 %v366
        %499 = vmatpush1.msra.mxu0 %v365
        %500 = vmatprep.subr.mxu0 %v368
        %501 = vmatpush1.msra.mxu0 %v367
        %502 = vmatprep.subr.mxu0 %v370
        %503 = vmatpush1.msra.mxu0 %v369
        %504 = vmatprep.subr.mxu0 %v372
        %505 = vmatpush1.msra.mxu0 %v371
        %506 = vmatprep.subr.mxu0 %v374
        %507 = vmatpush1.msra.mxu0 %v373
        %508 = vmatprep.subr.mxu0 %v376
        %509 = vmatpush1.msra.mxu0 %v375
        %510 = vmatprep.subr.mxu0 %v378
        %511 = vmatpush1.msra.mxu0 %v377
        %512 = vmatprep.subr.mxu0 %v380
        %513 = vmatpush1.msra.mxu0 %v379
        %514 = vmatprep.subr.mxu0 %v382
        %515 = vmatpush1.msra.mxu0 %v381
        %516 = vmatprep.subr.mxu0 0.0
        %517 = vmatpush1.msra.mxu0 0.0
        %518 = vmatprep.subr.mxu0 0.0
        %519 = vmatpush1.msra.mxu0 0.0
        %520 = vmatprep.subr.mxu0 0.0
        %521 = vmatpush1.msra.mxu0 0.0
        %522 = vmatprep.subr.mxu0 0.0
        %523 = vmatpush1.msra.mxu0 0.0
        %524 = vmatprep.subr.mxu0 0.0
        %525 = vmatpush1.msra.mxu0 0.0
        %526 = vmatprep.subr.mxu0 0.0
        %527 = vmatpush1.msra.mxu0 0.0
        %528 = vmatprep.subr.mxu0 0.0
        %529 = vmatpush1.msra.mxu0 0.0
        %530 = vmatprep.subr.mxu0 0.0
        %531 = vmatpush1.msra.mxu0 0.0
        %532 = vmatprep.subr.mxu0 0.0
        %533 = vmatpush1.msra.mxu0 0.0
        %534 = vmatprep.subr.mxu0 0.0
        %535 = vmatpush1.msra.mxu0 0.0
        %536 = vmatprep.subr.mxu0 0.0
        %537 = vmatpush1.msra.mxu0 0.0
        %538 = vmatprep.subr.mxu0 0.0
        %539 = vmatpush1.msra.mxu0 0.0
        %540 = vmatprep.subr.mxu0 0.0
        %541 = vmatpush1.msra.mxu0 0.0
        %542 = vmatprep.subr.mxu0 0.0
        %543 = vmatpush1.msra.mxu0 0.0
        %544 = vmatprep.subr.mxu0 0.0
        %545 = vmatpush1.msra.mxu0 0.0
        %546 = vmatprep.subr.mxu0 0.0
        %547 = vmatpush1.msra.mxu0 0.0
        %548 = vmatprep.mubr.f32.mxu0 0.0
        %549 = vmatmul.mubr.f32.gmra.mrb[0].mxu0 %v277
        %v550 = vpop.f32.mrb[0].mxu0
        %v551 = vadd.f32 %v462, %v550
        %v552 = vpop.f32.mrb[0].mxu0
        %v553 = vadd.f32 %v464, %v552
        %554 = vmatprep.mubr.f32.mxu0 0.0
        %555 = vmatmul.mubr.f32.gmra.mrb[0].mxu0 %v280
        %v556 = vpop.f32.mrb[0].mxu0
        %v557 = vadd.f32 %v468, %v556
        %v558 = vpop.f32.mrb[0].mxu0
        %v559 = vadd.f32 %v470, %v558
        %560 = vmatprep.mubr.f32.mxu0 0.0
        %561 = vmatmul.mubr.f32.gmra.mrb[0].mxu0 %v283
        %v562 = vpop.f32.mrb[0].mxu0
        %v563 = vadd.f32 %v474, %v562
        %v564 = vpop.f32.mrb[0].mxu0
        %v565 = vadd.f32 %v476, %v564
        %566 = vmatprep.mubr.f32.mxu0 0.0
        %567 = vmatmul.mubr.f32.gmra.mrb[0].mxu0 %v286
        %v568 = vpop.f32.mrb[0].mxu0
        %v569 = vadd.f32 %v480, %v568
        %v570 = vpop.f32.mrb[0].mxu0
        %v571 = vadd.f32 %v482, %v570
        %572 = vdwg.mxu0
        %v573 = vxor.u32 %v551, 2147483648
        %v574 = vxor.u32 %v553, 2147483648
        %v575 = vxor.u32 %v557, 2147483648
        %v576 = vxor.u32 %v559, 2147483648
        %v577 = vxor.u32 %v563, 2147483648
        %v578 = vxor.u32 %v565, 2147483648
        %v579 = vxor.u32 %v569, 2147483648
        %v580 = vxor.u32 %v571, 2147483648
        %v581 = vmul.f32 %v573, 1.442695
        %v582 = vpow.pop %v581
        %v583 = vmul.f32 %v574, 1.442695
        %v584 = vpow.pop %v583
        %v585 = vmul.f32 %v575, 1.442695
        %v586 = vpow.pop %v585
        %v587 = vmul.f32 %v576, 1.442695
        %v588 = vpow.pop %v587
        %v589 = vmul.f32 %v577, 1.442695
        %v590 = vpow.pop %v589
        %v591 = vmul.f32 %v578, 1.442695
        %v592 = vpow.pop %v591
        %v593 = vmul.f32 %v579, 1.442695
        %v594 = vpow.pop %v593
        %v595 = vmul.f32 %v580, 1.442695
        %v596 = vpow.pop %v595
        %v597 = vadd.f32 %v582, 1.0
        %v598 = vadd.f32 %v584, 1.0
        %v599 = vadd.f32 %v586, 1.0
        %v600 = vadd.f32 %v588, 1.0
        %v601 = vadd.f32 %v590, 1.0
        %v602 = vadd.f32 %v592, 1.0
        %v603 = vadd.f32 %v594, 1.0
        %v604 = vadd.f32 %v596, 1.0
        %v605 = vrcp.pop %v597
        %v606 = vmul.f32 1.0, %v605
        %v607 = vrcp.pop %v598
        %v608 = vmul.f32 1.0, %v607
        %v609 = vrcp.pop %v599
        %v610 = vmul.f32 1.0, %v609
        %v611 = vrcp.pop %v600
        %v612 = vmul.f32 1.0, %v611
        %v613 = vrcp.pop %v601
        %v614 = vmul.f32 1.0, %v613
        %v615 = vrcp.pop %v602
        %v616 = vmul.f32 1.0, %v615
        %v617 = vrcp.pop %v603
        %v618 = vmul.f32 1.0, %v617
        %v619 = vrcp.pop %v604
        %v620 = vmul.f32 1.0, %v619
        %v621 = vld [vmem:[#allocation7] sm:$0xff]
        %v622 = vld [vmem:[#allocation7 + $0x8] sm:$0xff]
        %v623 = vld [vmem:[#allocation7 + $0x10] sm:$0xff]
        %v624 = vld [vmem:[#allocation7 + $0x18] sm:$0xff]
        %v625 = vld [vmem:[#allocation7 + $0x20] sm:$0xff]
        %v626 = vld [vmem:[#allocation7 + $0x28] sm:$0xff]
        %v627 = vld [vmem:[#allocation7 + $0x30] sm:$0xff]
        %v628 = vld [vmem:[#allocation7 + $0x38] sm:$0xff]
        %v629 = vld [vmem:[#allocation7 + $0x40] sm:$0xff]
        %v630 = vld [vmem:[#allocation7 + $0x48] sm:$0xff]
        %v631 = vld [vmem:[#allocation7 + $0x50] sm:$0xff]
        %v632 = vld [vmem:[#allocation7 + $0x58] sm:$0xff]
        %v633 = vld [vmem:[#allocation7 + $0x60] sm:$0xff]
        %v634 = vld [vmem:[#allocation7 + $0x68] sm:$0xff]
        %v635 = vld [vmem:[#allocation7 + $0x70] sm:$0xff]
        %v636 = vld [vmem:[#allocation7 + $0x78] sm:$0xff]
        %v637 = vld [vmem:[#allocation7 + $0x80] sm:$0xff]
        %v638 = vld [vmem:[#allocation7 + $0x88] sm:$0xff]
        %v639 = vld [vmem:[#allocation7 + $0x90] sm:$0xff]
        %v640 = vld [vmem:[#allocation7 + $0x98] sm:$0xff]
        %v641 = vld [vmem:[#allocation7 + $0xa0] sm:$0xff]
        %v642 = vld [vmem:[#allocation7 + $0xa8] sm:$0xff]
        %v643 = vld [vmem:[#allocation7 + $0xb0] sm:$0xff]
        %v644 = vld [vmem:[#allocation7 + $0xb8] sm:$0xff]
        %v645 = vld [vmem:[#allocation7 + $0xc0] sm:$0xff]
        %v646 = vld [vmem:[#allocation7 + $0xc8] sm:$0xff]
        %v647 = vld [vmem:[#allocation7 + $0xd0] sm:$0xff]
        %v648 = vld [vmem:[#allocation7 + $0xd8] sm:$0xff]
        %v649 = vld [vmem:[#allocation7 + $0xe0] sm:$0xff]
        %v650 = vld [vmem:[#allocation7 + $0xe8] sm:$0xff]
        %v651 = vld [vmem:[#allocation7 + $0xf0] sm:$0xff]
        %v652 = vld [vmem:[#allocation7 + $0xf8] sm:$0xff]
        %v653 = vld [vmem:[#allocation7 + $0x100] sm:$0xff]
        %v654 = vld [vmem:[#allocation7 + $0x108] sm:$0xff]
        %v655 = vld [vmem:[#allocation7 + $0x110] sm:$0xff]
        %v656 = vld [vmem:[#allocation7 + $0x118] sm:$0xff]
        %v657 = vld [vmem:[#allocation7 + $0x120] sm:$0xff]
        %v658 = vld [vmem:[#allocation7 + $0x128] sm:$0xff]
        %v659 = vld [vmem:[#allocation7 + $0x130] sm:$0xff]
        %v660 = vld [vmem:[#allocation7 + $0x138] sm:$0xff]
        %v661 = vld [vmem:[#allocation7 + $0x140] sm:$0xff]
        %v662 = vld [vmem:[#allocation7 + $0x148] sm:$0xff]
        %v663 = vld [vmem:[#allocation7 + $0x150] sm:$0xff]
        %v664 = vld [vmem:[#allocation7 + $0x158] sm:$0xff]
        %v665 = vld [vmem:[#allocation7 + $0x160] sm:$0xff]
        %v666 = vld [vmem:[#allocation7 + $0x168] sm:$0xff]
        %v667 = vld [vmem:[#allocation7 + $0x170] sm:$0xff]
        %v668 = vld [vmem:[#allocation7 + $0x178] sm:$0xff]
        %v669 = vld [vmem:[#allocation7 + $0x180] sm:$0xff]
        %v670 = vld [vmem:[#allocation7 + $0x188] sm:$0xff]
        %v671 = vld [vmem:[#allocation7 + $0x190] sm:$0xff]
        %v672 = vld [vmem:[#allocation7 + $0x198] sm:$0xff]
        %v673 = vld [vmem:[#allocation7 + $0x1a0] sm:$0xff]
        %v674 = vld [vmem:[#allocation7 + $0x1a8] sm:$0xff]
        %v675 = vld [vmem:[#allocation7 + $0x1b0] sm:$0xff]
        %v676 = vld [vmem:[#allocation7 + $0x1b8] sm:$0xff]
        %v677 = vld [vmem:[#allocation7 + $0x1c0] sm:$0xff]
        %v678 = vld [vmem:[#allocation7 + $0x1c8] sm:$0xff]
        %v679 = vld [vmem:[#allocation7 + $0x1d0] sm:$0xff]
        %v680 = vld [vmem:[#allocation7 + $0x1d8] sm:$0xff]
        %v681 = vld [vmem:[#allocation7 + $0x1e0] sm:$0xff]
        %v682 = vld [vmem:[#allocation7 + $0x1e8] sm:$0xff]
        %v683 = vld [vmem:[#allocation7 + $0x1f0] sm:$0xff]
        %v684 = vld [vmem:[#allocation7 + $0x1f8] sm:$0xff]
        %v685 = vld [vmem:[#allocation7 + $0x200] sm:$0xff]
        %v686 = vld [vmem:[#allocation7 + $0x208] sm:$0xff]
        %v687 = vld [vmem:[#allocation7 + $0x210] sm:$0xff]
        %v688 = vld [vmem:[#allocation7 + $0x218] sm:$0xff]
        %v689 = vld [vmem:[#allocation7 + $0x220] sm:$0xff]
        %v690 = vld [vmem:[#allocation7 + $0x228] sm:$0xff]
        %v691 = vld [vmem:[#allocation7 + $0x230] sm:$0xff]
        %v692 = vld [vmem:[#allocation7 + $0x238] sm:$0xff]
        %v693 = vld [vmem:[#allocation7 + $0x240] sm:$0xff]
        %v694 = vld [vmem:[#allocation7 + $0x248] sm:$0xff]
        %v695 = vld [vmem:[#allocation7 + $0x250] sm:$0xff]
        %v696 = vld [vmem:[#allocation7 + $0x258] sm:$0xff]
        %v697 = vld [vmem:[#allocation7 + $0x260] sm:$0xff]
        %v698 = vld [vmem:[#allocation7 + $0x268] sm:$0xff]
        %v699 = vld [vmem:[#allocation7 + $0x270] sm:$0xff]
        %v700 = vld [vmem:[#allocation7 + $0x278] sm:$0xff]
        %v701 = vld [vmem:[#allocation7 + $0x280] sm:$0xff]
        %v702 = vld [vmem:[#allocation7 + $0x288] sm:$0xff]
        %v703 = vld [vmem:[#allocation7 + $0x290] sm:$0xff]
        %v704 = vld [vmem:[#allocation7 + $0x298] sm:$0xff]
        %v705 = vld [vmem:[#allocation7 + $0x2a0] sm:$0xff]
        %v706 = vld [vmem:[#allocation7 + $0x2a8] sm:$0xff]
        %v707 = vld [vmem:[#allocation7 + $0x2b0] sm:$0xff]
        %v708 = vld [vmem:[#allocation7 + $0x2b8] sm:$0xff]
        %v709 = vld [vmem:[#allocation7 + $0x2c0] sm:$0xff]
        %v710 = vld [vmem:[#allocation7 + $0x2c8] sm:$0xff]
        %v711 = vld [vmem:[#allocation7 + $0x2d0] sm:$0xff]
        %v712 = vld [vmem:[#allocation7 + $0x2d8] sm:$0xff]
        %v713 = vld [vmem:[#allocation7 + $0x2e0] sm:$0xff]
        %v714 = vld [vmem:[#allocation7 + $0x2e8] sm:$0xff]
        %v715 = vld [vmem:[#allocation7 + $0x2f0] sm:$0xff]
        %v716 = vld [vmem:[#allocation7 + $0x2f8] sm:$0xff]
        %v717 = vld [vmem:[%s4] sm:$0x7]
        %v719 = vlaneseq
        %v720 = vshrl.u32 %v719, 7
        %v721 = vsub.s32 0, %v720
        %v722 = vrot.slane %v717, %v721
        %v723 = vlaneseq
        %v724 = vshrl.u32 %v723, 7
        %v725 = vsub.s32 1, %v724
        %v726 = vrot.slane %v717, %v725
        %v727 = vlaneseq
        %v728 = vshrl.u32 %v727, 7
        %v729 = vsub.s32 2, %v728
        %v730 = vrot.slane %v717, %v729
        %734 = vmatprep.subr.mxu0 %v622
        %735 = vmatpush1.msra.mxu0 %v621
        %736 = vmatprep.subr.mxu0 %v625
        %737 = vmatpush1.msra.mxu0 %v624
        %738 = vmatprep.subr.mxu0 %v628
        %739 = vmatpush1.msra.mxu0 %v627
        %740 = vmatprep.subr.mxu0 %v631
        %741 = vmatpush1.msra.mxu0 %v630
        %742 = vmatprep.subr.mxu0 %v634
        %743 = vmatpush1.msra.mxu0 %v633
        %744 = vmatprep.subr.mxu0 %v637
        %745 = vmatpush1.msra.mxu0 %v636
        %746 = vmatprep.subr.mxu0 %v640
        %747 = vmatpush1.msra.mxu0 %v639
        %748 = vmatprep.subr.mxu0 %v643
        %749 = vmatpush1.msra.mxu0 %v642
        %750 = vmatprep.subr.mxu0 %v646
        %751 = vmatpush1.msra.mxu0 %v645
        %752 = vmatprep.subr.mxu0 %v649
        %753 = vmatpush1.msra.mxu0 %v648
        %754 = vmatprep.subr.mxu0 %v652
        %755 = vmatpush1.msra.mxu0 %v651
        %756 = vmatprep.subr.mxu0 %v655
        %757 = vmatpush1.msra.mxu0 %v654
        %758 = vmatprep.subr.mxu0 %v658
        %759 = vmatpush1.msra.mxu0 %v657
        %760 = vmatprep.subr.mxu0 %v661
        %761 = vmatpush1.msra.mxu0 %v660
        %762 = vmatprep.subr.mxu0 %v664
        %763 = vmatpush1.msra.mxu0 %v663
        %764 = vmatprep.subr.mxu0 %v667
        %765 = vmatpush1.msra.mxu0 %v666
        %766 = vmatprep.subr.mxu0 %v670
        %767 = vmatpush1.msra.mxu0 %v669
        %768 = vmatprep.subr.mxu0 %v673
        %769 = vmatpush1.msra.mxu0 %v672
        %770 = vmatprep.subr.mxu0 %v676
        %771 = vmatpush1.msra.mxu0 %v675
        %772 = vmatprep.subr.mxu0 %v679
        %773 = vmatpush1.msra.mxu0 %v678
        %774 = vmatprep.subr.mxu0 %v682
        %775 = vmatpush1.msra.mxu0 %v681
        %776 = vmatprep.subr.mxu0 %v685
        %777 = vmatpush1.msra.mxu0 %v684
        %778 = vmatprep.subr.mxu0 %v688
        %779 = vmatpush1.msra.mxu0 %v687
        %780 = vmatprep.subr.mxu0 %v691
        %781 = vmatpush1.msra.mxu0 %v690
        %782 = vmatprep.subr.mxu0 %v694
        %783 = vmatpush1.msra.mxu0 %v693
        %784 = vmatprep.subr.mxu0 %v697
        %785 = vmatpush1.msra.mxu0 %v696
        %786 = vmatprep.subr.mxu0 %v700
        %787 = vmatpush1.msra.mxu0 %v699
        %788 = vmatprep.subr.mxu0 %v703
        %789 = vmatpush1.msra.mxu0 %v702
        %790 = vmatprep.subr.mxu0 %v706
        %791 = vmatpush1.msra.mxu0 %v705
        %792 = vmatprep.subr.mxu0 %v709
        %793 = vmatpush1.msra.mxu0 %v708
        %794 = vmatprep.subr.mxu0 %v712
        %795 = vmatpush1.msra.mxu0 %v711
        %796 = vmatprep.subr.mxu0 %v715
        %797 = vmatpush1.msra.mxu0 %v714
        %798 = vmatprep.mubr.f32.mxu0 %v608
        %799 = vmatmul.mubr.f32.gmra.mrb[0].mxu0 %v606
        %v800 = vpop.f32.mrb[0].mxu0
        %v801 = vadd.f32 %v722, %v800
        %v802 = vpop.f32.mrb[0].mxu0
        %v803 = vadd.f32 %v726, %v802
        %804 = vmatprep.mubr.f32.mxu0 %v612
        %805 = vmatmul.mubr.f32.gmra.mrb[0].mxu0 %v610
        %v806 = vpop.f32.mrb[0].mxu0
        %v807 = vadd.f32 %v722, %v806
        %v808 = vpop.f32.mrb[0].mxu0
        %v809 = vadd.f32 %v726, %v808
        %810 = vmatprep.mubr.f32.mxu0 %v616
        %811 = vmatmul.mubr.f32.gmra.mrb[0].mxu0 %v614
        %v812 = vpop.f32.mrb[0].mxu0
        %v813 = vadd.f32 %v722, %v812
        %v814 = vpop.f32.mrb[0].mxu0
        %v815 = vadd.f32 %v726, %v814
        %816 = vmatprep.mubr.f32.mxu0 %v620
        %817 = vmatmul.mubr.f32.gmra.mrb[0].mxu0 %v618
        %v818 = vpop.f32.mrb[0].mxu0
        %v819 = vadd.f32 %v722, %v818
        %v820 = vpop.f32.mrb[0].mxu0
        %v821 = vadd.f32 %v726, %v820
        %822 = vdwg.mxu0
        %823 = vmatprep.subr.mxu0 0.0
        %824 = vmatpush1.msra.mxu0 %v623
        %825 = vmatprep.subr.mxu0 0.0
        %826 = vmatpush1.msra.mxu0 %v626
        %827 = vmatprep.subr.mxu0 0.0
        %828 = vmatpush1.msra.mxu0 %v629
        %829 = vmatprep.subr.mxu0 0.0
        %830 = vmatpush1.msra.mxu0 %v632
        %831 = vmatprep.subr.mxu0 0.0
        %832 = vmatpush1.msra.mxu0 %v635
        %833 = vmatprep.subr.mxu0 0.0
        %834 = vmatpush1.msra.mxu0 %v638
        %835 = vmatprep.subr.mxu0 0.0
        %836 = vmatpush1.msra.mxu0 %v641
        %837 = vmatprep.subr.mxu0 0.0
        %838 = vmatpush1.msra.mxu0 %v644
        %839 = vmatprep.subr.mxu0 0.0
        %840 = vmatpush1.msra.mxu0 %v647
        %841 = vmatprep.subr.mxu0 0.0
        %842 = vmatpush1.msra.mxu0 %v650
        %843 = vmatprep.subr.mxu0 0.0
        %844 = vmatpush1.msra.mxu0 %v653
        %845 = vmatprep.subr.mxu0 0.0
        %846 = vmatpush1.msra.mxu0 %v656
        %847 = vmatprep.subr.mxu0 0.0
        %848 = vmatpush1.msra.mxu0 %v659
        %849 = vmatprep.subr.mxu0 0.0
        %850 = vmatpush1.msra.mxu0 %v662
        %851 = vmatprep.subr.mxu0 0.0
        %852 = vmatpush1.msra.mxu0 %v665
        %853 = vmatprep.subr.mxu0 0.0
        %854 = vmatpush1.msra.mxu0 %v668
        %855 = vmatprep.subr.mxu0 0.0
        %856 = vmatpush1.msra.mxu0 %v671
        %857 = vmatprep.subr.mxu0 0.0
        %858 = vmatpush1.msra.mxu0 %v674
        %859 = vmatprep.subr.mxu0 0.0
        %860 = vmatpush1.msra.mxu0 %v677
        %861 = vmatprep.subr.mxu0 0.0
        %862 = vmatpush1.msra.mxu0 %v680
        %863 = vmatprep.subr.mxu0 0.0
        %864 = vmatpush1.msra.mxu0 %v683
        %865 = vmatprep.subr.mxu0 0.0
        %866 = vmatpush1.msra.mxu0 %v686
        %867 = vmatprep.subr.mxu0 0.0
        %868 = vmatpush1.msra.mxu0 %v689
        %869 = vmatprep.subr.mxu0 0.0
        %870 = vmatpush1.msra.mxu0 %v692
        %871 = vmatprep.subr.mxu0 0.0
        %872 = vmatpush1.msra.mxu0 %v695
        %873 = vmatprep.subr.mxu0 0.0
        %874 = vmatpush1.msra.mxu0 %v698
        %875 = vmatprep.subr.mxu0 0.0
        %876 = vmatpush1.msra.mxu0 %v701
        %877 = vmatprep.subr.mxu0 0.0
        %878 = vmatpush1.msra.mxu0 %v704
        %879 = vmatprep.subr.mxu0 0.0
        %880 = vmatpush1.msra.mxu0 %v707
        %881 = vmatprep.subr.mxu0 0.0
        %882 = vmatpush1.msra.mxu0 %v710
        %883 = vmatprep.subr.mxu0 0.0
        %884 = vmatpush1.msra.mxu0 %v713
        %885 = vmatprep.subr.mxu0 0.0
        %886 = vmatpush1.msra.mxu0 %v716
        %887 = vmatprep.mubr.f32.mxu0 %v608
        %888 = vmatmul.mubr.f32.gmra.mrb[0].mxu0 %v606
        %v889 = vpop.f32.mrb[0].mxu0
        %v890 = vadd.f32 %v730, %v889
        %v891 = vpop.f32.mrb[0].mxu0
        %892 = vmatprep.mubr.f32.mxu0 %v612
        %893 = vmatmul.mubr.f32.gmra.mrb[0].mxu0 %v610
        %v894 = vpop.f32.mrb[0].mxu0
        %v895 = vadd.f32 %v730, %v894
        %v896 = vpop.f32.mrb[0].mxu0
        %897 = vmatprep.mubr.f32.mxu0 %v616
        %898 = vmatmul.mubr.f32.gmra.mrb[0].mxu0 %v614
        %v899 = vpop.f32.mrb[0].mxu0
        %v900 = vadd.f32 %v730, %v899
        %v901 = vpop.f32.mrb[0].mxu0
        %902 = vmatprep.mubr.f32.mxu0 %v620
        %903 = vmatmul.mubr.f32.gmra.mrb[0].mxu0 %v618
        %v904 = vpop.f32.mrb[0].mxu0
        %v905 = vadd.f32 %v730, %v904
        %v906 = vpop.f32.mrb[0].mxu0
        %907 = vdwg.mxu0
        %908 = vst [vmem:[%s272] sm:$0xff] %v801
        %909 = vst [vmem:[%s272 + $0x8] sm:$0xff] %v803
        %910 = vst [vmem:[%s272 + $0x10] sm:$0xff] %v890
        %911 = vst [vmem:[%s272 + $0x18] sm:$0xff] %v807
        %912 = vst [vmem:[%s272 + $0x20] sm:$0xff] %v809
        %913 = vst [vmem:[%s272 + $0x28] sm:$0xff] %v895
        %914 = vst [vmem:[%s272 + $0x30] sm:$0xff] %v813
        %915 = vst [vmem:[%s272 + $0x38] sm:$0xff] %v815
        %916 = vst [vmem:[%s272 + $0x40] sm:$0xff] %v900
        %917 = vst [vmem:[%s272 + $0x48] sm:$0xff] %v819
        %918 = vst [vmem:[%s272 + $0x50] sm:$0xff] %v821
        %919 = vst [vmem:[%s272 + $0x58] sm:$0xff] %v905
        %s920 = sand.u32 %s141, 1
        %s921 = scalar_lea.sflag [#allocation4], %s920
        %s922 = sand.u32 %s141, 1
        %s923 = smul.addr %s922, 96
        %s924 = scalar_lea.vmem [#allocation8], %s923
        // Predicated region
        $region53: #{tpu_custom_call.1} parent=39 // pred_check
          %p925 = pneg %p151
        $region54: #{tpu_custom_call.1} parent=39 // pred_check_branch
          %927 = sbr.rel (%p925) target = $region56
        $region55: #{tpu_custom_call.1} parent=39 // pred_region
          %s928 = smul.u32 4, %s23
          %s930 = ssub.s32 1536, 1536
          %931 = vsyncadd %s921, %s930
          %s932 = smul.addr %s928, 3
          %s933 = smul.addr %s932, 128
          %s934 = scalar_lea.hbm %s5, %s933
          %s935 = sshll.u32 %s924, 4
          %s936 = int_to_ptr.vmem [resolvable:$true] %s935
          %941 = dma.vmem_to_hbm [thread:$0]  %s936, 1536, %s934, %s921, 384, 384, 24
        $region56: #{tpu_custom_call.1} parent=39 // pred_fallthru
          _
      $region40: #{tpu_custom_call.1} parent=5 // pred_fallthru
        _
      %p942 = scmp.le.s32.totalorder 2, %s18
      // Predicated region
      $region57: #{tpu_custom_call.1} parent=5 // pred_check
        %p943 = pneg %p942
      $region58: #{tpu_custom_call.1} parent=5 // pred_check_branch
        %945 = sbr.rel (%p943) target = $region60
      $region59: #{tpu_custom_call.1} parent=5 // pred_region
        %s946 = ssub.s32 %s18, 2
        // Predicated region
        $region61: #{tpu_custom_call.1} parent=59 // pred_check
          %p947 = pneg %p157
        $region62: #{tpu_custom_call.1} parent=59 // pred_check_branch
          %949 = sbr.rel (%p947) target = $region64
        $region63: #{tpu_custom_call.1} parent=59 // pred_region
          %s950 = sand.u32 %s142, 1
          %s951 = scalar_lea.sflag [#allocation4], %s950
          %s952 = sand.u32 %s142, 1
          %s953 = smul.addr %s952, 96
          %s954 = scalar_lea.vmem [#allocation8], %s953
          %955 = dma.done %s951, 1536
        $region64: #{tpu_custom_call.1} parent=59 // pred_fallthru
          _
      $region60: #{tpu_custom_call.1} parent=5 // pred_fallthru
        _
    $region6: #{tpu_custom_call.1} parent=1 // loop_footer
      %s22 = sadd.s32 1, %s18
    $region7: #{tpu_custom_call.1} parent=1 // loop_footer_branch
      %17 = sbr.rel target = $region3
    $region8: #{tpu_custom_call.1} parent=1 // loop_exit
      _
    %956 = vsyncpa [#allocation3], 1
    %s957 = scalar_lea.sflag [#allocation3], 1
    %958 = vsyncpa %s957, 1
    %959 = vsyncpa [#allocation6], 1
    %960 = vsyncpa [#allocation4], 1
    %s961 = scalar_lea.sflag [#allocation4], 1
    %962 = vsyncpa %s961, 1

</llo_original>
